<compile_context>
chip_gen: v7x
topology: tpu7x:2x2x1
jax: 0.10.0
libtpu: 0.0.40
codegen_flags: <defaults>
</compile_context>

<pallas_src>
import math
import functools

import jax
import jax.numpy as jnp
from jax.experimental import pallas as pl
from jax.experimental.pallas import tpu as pltpu


# ----------------------------------------------------------------------------- kernel
def _five_elements_kernel(
    x_ref,                 # [Bb, S, E]   hidden states (compute dtype)
    wq_ref, bq_ref,        # [E, E] cdt, [1, E] f32
    wk_ref, bk_ref,
    wv_ref, bv_ref,
    wmix_ref, bmix_ref,    # [H, Dh, E] cdt (pre-mixed five-element proj), [1, E] f32
    wo_ref, bo_ref,
    out_ref,               # [Bb, tq, E]
    mech_ref,              # [Bb, 1, S]   resident across the q-tile axis (accumulator)
    *rest,                 # ([attnw_ref [Bb,H,tq,S]],) + (k_scr, v_scr, q_scr)
    exp_dtype,
    store_attn,
):
    if store_attn:
        attnw_ref, k_scr, v_scr, q_scr = rest
    else:
        attnw_ref = None
        k_scr, v_scr, q_scr = rest

    Bb, S, E = x_ref.shape
    H, _, tq, Dh = q_scr.shape
    cdt = k_scr.dtype
    f32 = jnp.float32
    scale = 1.0 / math.sqrt(Dh)

    qt = pl.program_id(1)
    nq = pl.num_programs(1)

    # ---- K/V projection + head-major split: once per batch block --------------
    @pl.when(qt == 0)
    def _():
        xf = x_ref[...].reshape(Bb * S, E)
        k = (jnp.dot(xf, wk_ref[...], preferred_element_type=f32) + bk_ref[...]).astype(cdt)
        v = (jnp.dot(xf, wv_ref[...], preferred_element_type=f32) + bv_ref[...]).astype(cdt)
        k3 = k.reshape(Bb, S, E)
        v3 = v.reshape(Bb, S, E)
        for h in range(H):                      # E -> (H, Dh) split paid once per batch block
            lo = h * Dh
            k_scr[h] = k3[:, :, lo:lo + Dh]
            v_scr[h] = v3[:, :, lo:lo + Dh]
        mech_ref[...] = jnp.zeros_like(mech_ref)

    # ---- Q projection for this query tile (M = Bb*tq feeds the MXU) -----------
    q_start = pl.multiple_of(qt * tq, tq)
    xq = x_ref[:, pl.ds(q_start, tq), :].reshape(Bb * tq, E)
    q = jnp.dot(xq, wq_ref[...], preferred_element_type=f32) + bq_ref[...]
    q3 = (q * scale).reshape(Bb, tq, E).astype(cdt)   # fold 1/sqrt(Dh) into q once
    for h in range(H):
        q_scr[h] = q3[:, :, h * Dh:(h + 1) * Dh]

    # ---- per-head attention + five-element mix (fori_loop, ref[h] indexing) ---
    def head_body(h, carry):
        mixed, mech = carry
        qh = q_scr[h]                                   # [Bb, tq, Dh]
        kh = k_scr[h]                                   # [Bb, S,  Dh]
        vh = v_scr[h]
        s = jnp.einsum("bqd,bkd->bqk", qh, kh,
                       preferred_element_type=f32)      # [Bb, tq, S]
        m = jnp.max(s, axis=-1, keepdims=True)
        p = jnp.exp((s - m).astype(exp_dtype)).astype(f32)
        w = p * pl.reciprocal(jnp.sum(p, axis=-1, keepdims=True), approx=False)
        if store_attn:
            attnw_ref[:, h, :, :] = w.astype(attnw_ref.dtype)
        mech = mech + jnp.sum(w, axis=1, keepdims=True)            # [Bb, 1, S]
        o = jnp.einsum("bqk,bkd->bqd", w.astype(cdt), vh,
                       preferred_element_type=f32)                 # [Bb, tq, Dh]
        mixed = mixed + jnp.dot(o.reshape(Bb * tq, Dh).astype(cdt), wmix_ref[h],
                                preferred_element_type=f32)        # [Bb*tq, E]
        return mixed, mech

    mixed0 = jnp.zeros((Bb * tq, E), f32)
    mech0 = jnp.zeros((Bb, 1, S), f32)
    mixed, mech_t = jax.lax.fori_loop(0, H, head_body, (mixed0, mech0))

    mech_ref[...] += mech_t

    # ---- output projection -----------------------------------------------------
    mixed = mixed + bmix_ref[...]
    out = jnp.dot(mixed.astype(cdt), wo_ref[...], preferred_element_type=f32) + bo_ref[...]
    out_ref[...] = out.reshape(Bb, tq, E).astype(out_ref.dtype)

    # ---- mechanism strength: finalize after the last query tile ----------------
    @pl.when(qt == nq - 1)
    def _():
        col_mean = mech_ref[...] * (1.0 / S)
        mn = jnp.min(col_mean, axis=-1, keepdims=True)
        mx = jnp.max(col_mean, axis=-1, keepdims=True)
        mech_ref[...] = (col_mean - mn) / (mx - mn + 1e-9)


# ----------------------------------------------------------------------------- helpers
def _probe_copy_kernel(x_ref, o_ref):
    o_ref[...] = x_ref[...]


@functools.lru_cache(maxsize=None)
def _buffered_one_supported():
    """Probe once whether pipeline_mode=pl.Buffered(1) compiles on this install."""
    if not hasattr(pl, "Buffered"):
        return False
    try:
        fn = pl.pallas_call(
            _probe_copy_kernel,
            grid=(2,),
            in_specs=[pl.BlockSpec((8, 128), lambda i: (i, 0),
                                   pipeline_mode=pl.Buffered(1))],
            out_specs=pl.BlockSpec((8, 128), lambda i: (i, 0)),
            out_shape=jax.ShapeDtypeStruct((16, 128), jnp.float32),
        )
        jax.jit(fn).lower(jax.ShapeDtypeStruct((16, 128), jnp.float32)).compile()
        return True
    except Exception:
        return False


@functools.lru_cache(maxsize=None)
def _vmem_capacity_bytes():
    try:
        return int(pltpu.get_tpu_info().vmem_capacity_bytes)
    except Exception:
        return 64 * 2**20            # conservative (v7x-sized) fallback


def _default_exp_dtype(compute_dtype):
    """bf16 exp on chips with a bf16 EUP (v6e/v7x); f32 on v5* and for f32 compute."""
    if jnp.dtype(compute_dtype) == jnp.float32:
        return jnp.float32
    try:
        kind = jax.devices()[0].device_kind.lower()
    except Exception:
        kind = ""
    if "v5" in kind:
        return jnp.float32
    return jnp.bfloat16


def _pick_tq(S, cap, step):
    cap = min(cap, S)
    for st in (step, 8):
        t = cap - cap % st
        while t >= st:
            if S % t == 0:
                return t
            t -= st
    return S


def _estimate_vmem(bb, tq, S, E, H, cdt_size, out_size, adt_size, store_attn, single_buf):
    inv_buf = 1 if single_buf else 2
    weights = inv_buf * (5 * E * E * cdt_size + 5 * max(E, 128) * 4)
    xblk = inv_buf * bb * S * E * cdt_size
    outblk = 2 * bb * tq * E * out_size
    mechblk = 2 * bb * max(S, 128) * 4
    attnblk = (2 * bb * H * tq * S * adt_size) if store_attn else 0
    scratch = (2 * bb * S * E + bb * tq * E) * cdt_size
    temps = 6 * bb * tq * S * 4 + 6 * bb * tq * E * 4
    return weights + xblk + outblk + mechblk + attnblk + scratch + temps


# ----------------------------------------------------------------------------- wrapper
def five_elements_attention(x, params, num_heads, *,
                            compute_dtype=jnp.bfloat16,
                            attn_weights_dtype=None,
                            exp_dtype=None,
                            q_tile=256,
                            batch_block=None,
                            return_attention_weights=True):
    """Forward pass of FiveElementsAttention.  Returns (output, info)."""
    # TODO(synk): attention_mask / past_key_values not supported (forward default is None).
    B, S, E = x.shape
    H = num_heads
    Dh = E // H
    assert Dh * H == E, "embed_dim must be divisible by num_heads"
    assert S % 8 == 0, "seq_len must be a multiple of 8 (f32 sublane tile)"

    out_dtype = x.dtype
    cdt = jnp.dtype(compute_dtype)
    adt = jnp.dtype(cdt if attn_weights_dtype is None else attn_weights_dtype)
    edt = jnp.dtype(_default_exp_dtype(cdt) if exp_dtype is None else exp_dtype)
    f32 = jnp.float32

    vmem_cap = _vmem_capacity_bytes()
    single_buf = _buffered_one_supported()

    # ---- generation/VMEM aware tiling ----------------------------------------
    m_cap = 512 if vmem_cap > 96 * 2**20 else 256     # bb*tq cap (v5e/v6e vs v7x)
    step = 16 if cdt.itemsize == 2 else 8
    tq = _pick_tq(S, min(q_tile, m_cap), step)

    def est(bb_):
        return _estimate_vmem(bb_, tq, S, E, H, cdt.itemsize,
                              jnp.dtype(out_dtype).itemsize, adt.itemsize,
                              return_attention_weights, single_buf)

    budget = int(0.85 * (vmem_cap - 8 * 2**20))
    if batch_block is None:
        bb = 1
        for cand in range(1, B + 1):
            if B % cand == 0 and cand * tq <= m_cap and est(cand) <= budget:
                bb = cand
    else:
        bb = batch_block
    assert B % bb == 0

    # softmax(element_weights) and the pre-mixed projection (split head-major):
    #   sum_i ew_i * (A @ W_i + b_i) == A @ (sum_i ew_i W_i) + sum_i ew_i b_i
    ew = jax.nn.softmax(params["element_weights"].astype(f32))
    w_mix = jnp.tensordot(ew, params["we"], axes=1).reshape(H, Dh, E)
    b_mix = jnp.tensordot(ew, params["be"], axes=1)

    grid = (B // bb, S // tq)

    def inv_spec(shape, imap):
        if single_buf:
            return pl.BlockSpec(shape, imap, pipeline_mode=pl.Buffered(1))
        return pl.BlockSpec(shape, imap)

    wspec = inv_spec((E, E), lambda bi, qt: (0, 0))
    bspec = inv_spec((1, E), lambda bi, qt: (0, 0))
    in_specs = [
        inv_spec((bb, S, E), lambda bi, qt: (bi, 0, 0)),     # hidden states (full seq)
        wspec, bspec,                                        # q proj
        wspec, bspec,                                        # k proj
        wspec, bspec,                                        # v proj
        inv_spec((H, Dh, E), lambda bi, qt: (0, 0, 0)),      # pre-mixed elements
        bspec,
        wspec, bspec,                                        # out proj
    ]
    out_specs = [
        pl.BlockSpec((bb, tq, E), lambda bi, qt: (bi, qt, 0)),
        pl.BlockSpec((bb, 1, S), lambda bi, qt: (bi, 0, 0)),
    ]
    out_shape = [
        jax.ShapeDtypeStruct((B, S, E), out_dtype),
        jax.ShapeDtypeStruct((B, 1, S), f32),
    ]
    if return_attention_weights:
        out_specs.append(pl.BlockSpec((bb, H, tq, S), lambda bi, qt: (bi, 0, qt, 0)))
        out_shape.append(jax.ShapeDtypeStruct((B, H, S, S), adt))

    scratch_shapes = [
        pltpu.VMEM((H, bb, S, Dh), cdt),     # K, head-major (persists across q tiles)
        pltpu.VMEM((H, bb, S, Dh), cdt),     # V
        pltpu.VMEM((H, bb, tq, Dh), cdt),    # Q (current tile)
    ]

    # scoped VMEM limit: resident estimate + headroom, clamped to physical VMEM.
    vmem_limit = int(min(vmem_cap - 4 * 2**20,
                         max(32 * 2**20, est(bb) + 16 * 2**20)))

    kernel = functools.partial(_five_elements_kernel,
                               exp_dtype=edt,
                               store_attn=return_attention_weights)

    results = pl.pallas_call(
        kernel,
        grid=grid,
        in_specs=in_specs,
        out_specs=tuple(out_specs),
        out_shape=tuple(out_shape),
        scratch_shapes=scratch_shapes,
        compiler_params=pltpu.CompilerParams(
            dimension_semantics=("parallel", "arbitrary"),
            vmem_limit_bytes=vmem_limit,
        ),
    )(
        x.astype(cdt),
        params["wq"].astype(cdt), params["bq"].astype(f32).reshape(1, E),
        params["wk"].astype(cdt), params["bk"].astype(f32).reshape(1, E),
        params["wv"].astype(cdt), params["bv"].astype(f32).reshape(1, E),
        w_mix.astype(cdt), b_mix.astype(f32).reshape(1, E),
        params["wo"].astype(cdt), params["bo"].astype(f32).reshape(1, E),
    )

    if return_attention_weights:
        out, mech, attnw = results
    else:
        (out, mech), attnw = results, None

    names = ("wood", "fire", "earth", "metal", "water")
    info = {
        "mechanism_strength": mech[:, 0, :],
        # JAX scalars (no float() -> no device->host sync, jit safe).
        "element_composition": {n: ew[i] for i, n in enumerate(names)},
        "attention_weights": attnw,
    }
    return out, info


# ----------------------------------------------------------------------------- params
def init_params(key, E):
    ks = jax.random.split(key, 16)
    inv = 1.0 / math.sqrt(E)

    def lin(kw, kb):
        w = jax.random.normal(kw, (E, E), jnp.float32) * inv
        b = jax.random.uniform(kb, (E,), jnp.float32, -inv, inv)
        return w, b

    wq, bq = lin(ks[0], ks[1])
    wk, bk = lin(ks[2], ks[3])
    wv, bv = lin(ks[4], ks[5])
    wo, bo = lin(ks[6], ks[7])

    eye = jnp.eye(E, dtype=jnp.float32)
    w_wood, b_wood = eye, jnp.ones((E,), jnp.float32)
    w_fire = eye + 0.1 * jax.random.normal(ks[8], (E, E), jnp.float32)
    b_fire = jax.random.uniform(ks[9], (E,), jnp.float32, -inv, inv)
    kb_bound = math.sqrt(6.0 / E)
    w_earth = jax.random.uniform(ks[10], (E, E), jnp.float32, -kb_bound, kb_bound)
    b_earth = jax.random.uniform(ks[11], (E,), jnp.float32, -inv, inv)
    mask = (jax.random.uniform(ks[12], (E, E), jnp.float32) > 0.7).astype(jnp.float32)
    w_metal = eye * mask
    b_metal = jax.random.uniform(ks[13], (E,), jnp.float32, -inv, inv)
    xb = math.sqrt(6.0 / (2 * E))
    w_water = jax.random.uniform(ks[14], (E, E), jnp.float32, -xb, xb)
    b_water = jax.random.uniform(ks[15], (E,), jnp.float32, -inv, inv)

    return {
        "wq": wq, "bq": bq, "wk": wk, "bk": bk, "wv": wv, "bv": bv,
        "wo": wo, "bo": bo,
        "we": jnp.stack([w_wood, w_fire, w_earth, w_metal, w_water], axis=0),
        "be": jnp.stack([b_wood, b_fire, b_earth, b_metal, b_water], axis=0),
        "element_weights": jnp.ones((5,), jnp.float32) / 5.0,
    }


# ----------------------------------------------------------------------------- references
def reference_module(x, params, H):
    """Pure-JAX f32 reference, faithful to the PyTorch module formulation."""
    B, S, E = x.shape
    Dh = E // H
    q = x @ params["wq"] + params["bq"]
    k = x @ params["wk"] + params["bk"]
    v = x @ params["wv"] + params["bv"]

    def heads(t):
        return t.reshape(B, S, H, Dh).transpose(0, 2, 1, 3)

    qh, kh, vh = heads(q), heads(k), heads(v)
    scores = jnp.einsum("bhqd,bhkd->bhqk", qh, kh) / math.sqrt(Dh)
    w = jax.nn.softmax(scores, axis=-1)
    o = jnp.einsum("bhqk,bhkd->bhqd", w, vh).transpose(0, 2, 1, 3).reshape(B, S, E)

    mech = w.sum(axis=1).mean(axis=1)
    mech = (mech - mech.min(axis=-1, keepdims=True)) / (
        mech.max(axis=-1, keepdims=True) - mech.min(axis=-1, keepdims=True) + 1e-9)

    ew = jax.nn.softmax(params["element_weights"])
    acc = jnp.zeros_like(o)
    for i in range(5):
        acc = acc + ew[i] * (o @ params["we"][i] + params["be"][i])
    out = acc @ params["wo"] + params["bo"]
    return out, mech, w


def reference_recipe(x, params, H, compute_dtype, exp_dtype):
    """Mirrors the kernel's precision recipe (low-precision dots/exp, f32 accumulation)."""
    cdt = jnp.dtype(compute_dtype)
    B, S, E = x.shape
    Dh = E // H

    def mm(a, w):
        return jnp.dot(a.astype(cdt), w.astype(cdt), preferred_element_type=jnp.float32)

    x2 = x.astype(cdt).reshape(B * S, E)
    q = mm(x2, params["wq"]) + params["bq"]
    k = mm(x2, params["wk"]) + params["bk"]
    v = mm(x2, params["wv"]) + params["bv"]
    q3 = (q * (1.0 / math.sqrt(Dh))).reshape(B, S, E).astype(cdt)
    k3 = k.reshape(B, S, E).astype(cdt)
    v3 = v.reshape(B, S, E).astype(cdt)

    w_heads = []
    o = jnp.zeros((B, S, E), jnp.float32)
    for h in range(H):
        lo = h * Dh
        qh, kh, vh = q3[..., lo:lo + Dh], k3[..., lo:lo + Dh], v3[..., lo:lo + Dh]
        s = jnp.einsum("bqd,bkd->bqk", qh, kh, preferred_element_type=jnp.float32)
        p = jnp.exp((s - s.max(-1, keepdims=True)).astype(exp_dtype)).astype(jnp.float32)
        wgt = p / p.sum(-1, keepdims=True)
        w_heads.append(wgt)
        oh = jnp.einsum("bqk,bkd->bqd", wgt.astype(cdt), vh,
                        preferred_element_type=jnp.float32)
        o = o.at[..., lo:lo + Dh].set(oh)

    w_all = jnp.stack(w_heads, axis=1)
    mech = w_all.sum(axis=1).mean(axis=1)
    mech = (mech - mech.min(-1, keepdims=True)) / (
        mech.max(-1, keepdims=True) - mech.min(-1, keepdims=True) + 1e-9)

    ew = jax.nn.softmax(params["element_weights"])
    w_mix = jnp.tensordot(ew, params["we"], axes=1)
    b_mix = jnp.tensordot(ew, params["be"], axes=1)
    mixed = mm(o.reshape(B * S, E), w_mix) + b_mix
    out = mm(mixed, params["wo"]) + params["bo"]
    return out.reshape(B, S, E), mech, w_all


# ----------------------------------------------------------------------------- main
if __name__ == "__main__":
    B, S, E, H = 2, 8, 32, 4

    key = jax.random.PRNGKey(0)
    k_x, k_p = jax.random.split(key)
    x = jax.random.normal(k_x, (B, S, E), jnp.float32)
    params = init_params(k_p, E)

    # ---- exact path (f32 MXU): must match the module-faithful reference -------
    out32, info32 = five_elements_attention(x, params, num_heads=H,
                                            compute_dtype=jnp.float32)
    out32 = jax.block_until_ready(out32)
    with jax.default_matmul_precision("highest"):
        ref_out, ref_mech, ref_w = reference_module(x, params, H)
    assert jnp.allclose(out32, ref_out, atol=1e-4, rtol=1e-4), "f32 output mismatch"
    assert jnp.allclose(info32["mechanism_strength"], ref_mech, atol=1e-4, rtol=1e-4), \
        "f32 mechanism_strength mismatch"
    assert jnp.allclose(info32["attention_weights"], ref_w, atol=1e-4, rtol=1e-4), \
        "f32 attention_weights mismatch"

    # ---- fast path (bf16 MXU, bf16 exp on v6e/v7x, jitted): checked against a
    # ---- reference using the identical precision recipe ------------------------
    fea = jax.jit(functools.partial(five_elements_attention, num_heads=H))
    out16, info16 = fea(x, params)
    out16 = jax.block_until_ready(out16)
    edt = _default_exp_dtype(jnp.bfloat16)
    r_out, r_mech, r_w = reference_recipe(x, params, H, jnp.bfloat16, edt)
    assert jnp.allclose(out16, r_out, atol=2e-2, rtol=2e-2), "bf16 output mismatch"
    assert jnp.allclose(info16["mechanism_strength"], r_mech, atol=2e-2, rtol=2e-2), \
        "bf16 mechanism_strength mismatch"
    assert jnp.allclose(info16["attention_weights"].astype(jnp.float32), r_w,
                        atol=1e-2, rtol=3e-2), "bf16 attention_weights mismatch"

    # ---- no-attention-weights path (skips the [B,H,S,S] HBM stream) ------------
    out_na, info_na = five_elements_attention(x, params, num_heads=H,
                                              return_attention_weights=False)
    out_na = jax.block_until_ready(out_na)
    assert info_na["attention_weights"] is None
    assert jnp.allclose(out_na, r_out, atol=2e-2, rtol=2e-2), "no-attnw output mismatch"
    assert jnp.allclose(info_na["mechanism_strength"], r_mech, atol=2e-2, rtol=2e-2), \
        "no-attnw mechanism_strength mismatch"

    print("KERNEL_OK")
</pallas_src>

<mosaic_0001>
module attributes {stable_mosaic.version = 11 : i64} {
  func.func @_five_elements_kernel(%arg0: i32, %arg1: i32, %arg2: memref<2x8x32xf32, #tpu.memory_space<vmem>>, %arg3: memref<32x32xf32, #tpu.memory_space<vmem>>, %arg4: memref<1x32xf32, #tpu.memory_space<vmem>>, %arg5: memref<32x32xf32, #tpu.memory_space<vmem>>, %arg6: memref<1x32xf32, #tpu.memory_space<vmem>>, %arg7: memref<32x32xf32, #tpu.memory_space<vmem>>, %arg8: memref<1x32xf32, #tpu.memory_space<vmem>>, %arg9: memref<4x8x32xf32, #tpu.memory_space<vmem>>, %arg10: memref<1x32xf32, #tpu.memory_space<vmem>>, %arg11: memref<32x32xf32, #tpu.memory_space<vmem>>, %arg12: memref<1x32xf32, #tpu.memory_space<vmem>>, %arg13: memref<2x8x32xf32, #tpu.memory_space<vmem>>, %arg14: memref<2x1x8xf32, #tpu.memory_space<vmem>>, %arg15: memref<2x4x8x8xf32, #tpu.memory_space<vmem>>, %arg16: memref<4x2x8x8xf32, #tpu.memory_space<vmem>>, %arg17: memref<4x2x8x8xf32, #tpu.memory_space<vmem>>, %arg18: memref<4x2x8x8xf32, #tpu.memory_space<vmem>>) attributes {dimension_semantics = [#tpu.dimension_semantics<parallel>, #tpu.dimension_semantics<arbitrary>], iteration_bounds = array<i64: 1, 1>, scalar_prefetch = 0 : i64, scratch_operands = 3 : i64, tpu.core_type = #tpu.core_type<tc>, window_params = [{transform_indices = @transform_0, window_bounds = array<i64: 2, 8, 32>}, {pipeline_mode = #tpu.pipeline_mode<synchronous>, transform_indices = @transform_1, window_bounds = array<i64: 32, 32>}, {pipeline_mode = #tpu.pipeline_mode<synchronous>, transform_indices = @transform_2, window_bounds = array<i64: 1, 32>}, {pipeline_mode = #tpu.pipeline_mode<synchronous>, transform_indices = @transform_3, window_bounds = array<i64: 32, 32>}, {pipeline_mode = #tpu.pipeline_mode<synchronous>, transform_indices = @transform_4, window_bounds = array<i64: 1, 32>}, {pipeline_mode = #tpu.pipeline_mode<synchronous>, transform_indices = @transform_5, window_bounds = array<i64: 32, 32>}, {pipeline_mode = #tpu.pipeline_mode<synchronous>, transform_indices = @transform_6, window_bounds = array<i64: 1, 32>}, {pipeline_mode = #tpu.pipeline_mode<synchronous>, transform_indices = @transform_7, window_bounds = array<i64: 4, 8, 32>}, {pipeline_mode = #tpu.pipeline_mode<synchronous>, transform_indices = @transform_8, window_bounds = array<i64: 1, 32>}, {pipeline_mode = #tpu.pipeline_mode<synchronous>, transform_indices = @transform_9, window_bounds = array<i64: 32, 32>}, {pipeline_mode = #tpu.pipeline_mode<synchronous>, transform_indices = @transform_10, window_bounds = array<i64: 1, 32>}, {transform_indices = @transform_11, window_bounds = array<i64: 2, 8, 32>}, {transform_indices = @transform_12, window_bounds = array<i64: 2, 1, 8>}, {transform_indices = @transform_13, window_bounds = array<i64: 2, 4, 8, 8>}]} {
    %c0_i32 = arith.constant 0 : i32
    %0 = arith.cmpi eq, %arg1, %c0_i32 : i32
    %1 = arith.extui %0 : i1 to i32
    %c0_i32_0 = arith.constant 0 : i32
    %2 = arith.cmpi ne, %1, %c0_i32_0 : i32
    scf.if %2 {
      %c0_42 = arith.constant 0 : index
      %c0_43 = arith.constant 0 : index
      %c0_44 = arith.constant 0 : index
      %52 = vector.load %arg2[%c0_42, %c0_43, %c0_44] : memref<2x8x32xf32, #tpu.memory_space<vmem>>, vector<2x8x32xf32>
      %53 = vector.shape_cast %52 : vector<2x8x32xf32> to vector<16x32xf32>
      %c0_45 = arith.constant 0 : index
      %c0_46 = arith.constant 0 : index
      %54 = vector.load %arg5[%c0_45, %c0_46] : memref<32x32xf32, #tpu.memory_space<vmem>>, vector<32x32xf32>
      %cst_47 = arith.constant dense<0.000000e+00> : vector<16x32xf32>
      %55 = tpu.matmul %53, %54, %cst_47 {dimension_numbers = #tpu.dot_dimension_numbers<[1], [0], [0], [1], [0, 0, 1, 1], [], []>} : vector<16x32xf32>, vector<32x32xf32>, vector<16x32xf32> -> vector<16x32xf32>
      %c0_48 = arith.constant 0 : index
      %c0_49 = arith.constant 0 : index
      %56 = vector.load %arg6[%c0_48, %c0_49] : memref<1x32xf32, #tpu.memory_space<vmem>>, vector<1x32xf32>
      %57 = vector.broadcast %56 : vector<1x32xf32> to vector<16x32xf32>
      %58 = arith.addf %55, %57 : vector<16x32xf32>
      %c0_50 = arith.constant 0 : index
      %c0_51 = arith.constant 0 : index
      %59 = vector.load %arg7[%c0_50, %c0_51] : memref<32x32xf32, #tpu.memory_space<vmem>>, vector<32x32xf32>
      %cst_52 = arith.constant dense<0.000000e+00> : vector<16x32xf32>
      %60 = tpu.matmul %53, %59, %cst_52 {dimension_numbers = #tpu.dot_dimension_numbers<[1], [0], [0], [1], [0, 0, 1, 1], [], []>} : vector<16x32xf32>, vector<32x32xf32>, vector<16x32xf32> -> vector<16x32xf32>
      %c0_53 = arith.constant 0 : index
      %c0_54 = arith.constant 0 : index
      %61 = vector.load %arg8[%c0_53, %c0_54] : memref<1x32xf32, #tpu.memory_space<vmem>>, vector<1x32xf32>
      %62 = vector.broadcast %61 : vector<1x32xf32> to vector<16x32xf32>
      %63 = arith.addf %60, %62 : vector<16x32xf32>
      %64 = vector.shape_cast %58 : vector<16x32xf32> to vector<2x8x32xf32>
      %65 = vector.shape_cast %63 : vector<16x32xf32> to vector<2x8x32xf32>
      %66 = vector.extract_strided_slice %64 {offsets = [0, 0, 0], sizes = [2, 8, 8], strides = [1, 1, 1]} : vector<2x8x32xf32> to vector<2x8x8xf32>
      %c0_55 = arith.constant 0 : index
      %c0_56 = arith.constant 0 : index
      %c0_57 = arith.constant 0 : index
      %c0_58 = arith.constant 0 : index
      %67 = vector.load %arg16[%c0_55, %c0_56, %c0_57, %c0_58] : memref<4x2x8x8xf32, #tpu.memory_space<vmem>>, vector<1x2x8x8xf32>
      %68 = vector.shape_cast %67 : vector<1x2x8x8xf32> to vector<2x8x8xf32>
      %69 = vector.shape_cast %66 : vector<2x8x8xf32> to vector<1x2x8x8xf32>
      tpu.vector_store %arg16[%c0_55, %c0_56, %c0_57, %c0_58], %69 {strides = array<i32>} : memref<4x2x8x8xf32, #tpu.memory_space<vmem>>, vector<1x2x8x8xf32>,
      %70 = vector.extract_strided_slice %65 {offsets = [0, 0, 0], sizes = [2, 8, 8], strides = [1, 1, 1]} : vector<2x8x32xf32> to vector<2x8x8xf32>
      %c0_59 = arith.constant 0 : index
      %c0_60 = arith.constant 0 : index
      %c0_61 = arith.constant 0 : index
      %c0_62 = arith.constant 0 : index
      %71 = vector.load %arg17[%c0_59, %c0_60, %c0_61, %c0_62] : memref<4x2x8x8xf32, #tpu.memory_space<vmem>>, vector<1x2x8x8xf32>
      %72 = vector.shape_cast %71 : vector<1x2x8x8xf32> to vector<2x8x8xf32>
      %73 = vector.shape_cast %70 : vector<2x8x8xf32> to vector<1x2x8x8xf32>
      tpu.vector_store %arg17[%c0_59, %c0_60, %c0_61, %c0_62], %73 {strides = array<i32>} : memref<4x2x8x8xf32, #tpu.memory_space<vmem>>, vector<1x2x8x8xf32>,
      %74 = vector.extract_strided_slice %64 {offsets = [0, 0, 8], sizes = [2, 8, 8], strides = [1, 1, 1]} : vector<2x8x32xf32> to vector<2x8x8xf32>
      %c1_63 = arith.constant 1 : index
      %c0_64 = arith.constant 0 : index
      %c0_65 = arith.constant 0 : index
      %c0_66 = arith.constant 0 : index
      %75 = vector.load %arg16[%c1_63, %c0_64, %c0_65, %c0_66] : memref<4x2x8x8xf32, #tpu.memory_space<vmem>>, vector<1x2x8x8xf32>
      %76 = vector.shape_cast %75 : vector<1x2x8x8xf32> to vector<2x8x8xf32>
      %77 = vector.shape_cast %74 : vector<2x8x8xf32> to vector<1x2x8x8xf32>
      tpu.vector_store %arg16[%c1_63, %c0_64, %c0_65, %c0_66], %77 {strides = array<i32>} : memref<4x2x8x8xf32, #tpu.memory_space<vmem>>, vector<1x2x8x8xf32>,
      %78 = vector.extract_strided_slice %65 {offsets = [0, 0, 8], sizes = [2, 8, 8], strides = [1, 1, 1]} : vector<2x8x32xf32> to vector<2x8x8xf32>
      %c1_67 = arith.constant 1 : index
      %c0_68 = arith.constant 0 : index
      %c0_69 = arith.constant 0 : index
      %c0_70 = arith.constant 0 : index
      %79 = vector.load %arg17[%c1_67, %c0_68, %c0_69, %c0_70] : memref<4x2x8x8xf32, #tpu.memory_space<vmem>>, vector<1x2x8x8xf32>
      %80 = vector.shape_cast %79 : vector<1x2x8x8xf32> to vector<2x8x8xf32>
      %81 = vector.shape_cast %78 : vector<2x8x8xf32> to vector<1x2x8x8xf32>
      tpu.vector_store %arg17[%c1_67, %c0_68, %c0_69, %c0_70], %81 {strides = array<i32>} : memref<4x2x8x8xf32, #tpu.memory_space<vmem>>, vector<1x2x8x8xf32>,
      %82 = vector.extract_strided_slice %64 {offsets = [0, 0, 16], sizes = [2, 8, 8], strides = [1, 1, 1]} : vector<2x8x32xf32> to vector<2x8x8xf32>
      %c2_71 = arith.constant 2 : index
      %c0_72 = arith.constant 0 : index
      %c0_73 = arith.constant 0 : index
      %c0_74 = arith.constant 0 : index
      %83 = vector.load %arg16[%c2_71, %c0_72, %c0_73, %c0_74] : memref<4x2x8x8xf32, #tpu.memory_space<vmem>>, vector<1x2x8x8xf32>
      %84 = vector.shape_cast %83 : vector<1x2x8x8xf32> to vector<2x8x8xf32>
      %85 = vector.shape_cast %82 : vector<2x8x8xf32> to vector<1x2x8x8xf32>
      tpu.vector_store %arg16[%c2_71, %c0_72, %c0_73, %c0_74], %85 {strides = array<i32>} : memref<4x2x8x8xf32, #tpu.memory_space<vmem>>, vector<1x2x8x8xf32>,
      %86 = vector.extract_strided_slice %65 {offsets = [0, 0, 16], sizes = [2, 8, 8], strides = [1, 1, 1]} : vector<2x8x32xf32> to vector<2x8x8xf32>
      %c2_75 = arith.constant 2 : index
      %c0_76 = arith.constant 0 : index
      %c0_77 = arith.constant 0 : index
      %c0_78 = arith.constant 0 : index
      %87 = vector.load %arg17[%c2_75, %c0_76, %c0_77, %c0_78] : memref<4x2x8x8xf32, #tpu.memory_space<vmem>>, vector<1x2x8x8xf32>
      %88 = vector.shape_cast %87 : vector<1x2x8x8xf32> to vector<2x8x8xf32>
      %89 = vector.shape_cast %86 : vector<2x8x8xf32> to vector<1x2x8x8xf32>
      tpu.vector_store %arg17[%c2_75, %c0_76, %c0_77, %c0_78], %89 {strides = array<i32>} : memref<4x2x8x8xf32, #tpu.memory_space<vmem>>, vector<1x2x8x8xf32>,
      %90 = vector.extract_strided_slice %64 {offsets = [0, 0, 24], sizes = [2, 8, 8], strides = [1, 1, 1]} : vector<2x8x32xf32> to vector<2x8x8xf32>
      %c3_79 = arith.constant 3 : index
      %c0_80 = arith.constant 0 : index
      %c0_81 = arith.constant 0 : index
      %c0_82 = arith.constant 0 : index
      %91 = vector.load %arg16[%c3_79, %c0_80, %c0_81, %c0_82] : memref<4x2x8x8xf32, #tpu.memory_space<vmem>>, vector<1x2x8x8xf32>
      %92 = vector.shape_cast %91 : vector<1x2x8x8xf32> to vector<2x8x8xf32>
      %93 = vector.shape_cast %90 : vector<2x8x8xf32> to vector<1x2x8x8xf32>
      tpu.vector_store %arg16[%c3_79, %c0_80, %c0_81, %c0_82], %93 {strides = array<i32>} : memref<4x2x8x8xf32, #tpu.memory_space<vmem>>, vector<1x2x8x8xf32>,
      %94 = vector.extract_strided_slice %65 {offsets = [0, 0, 24], sizes = [2, 8, 8], strides = [1, 1, 1]} : vector<2x8x32xf32> to vector<2x8x8xf32>
      %c3_83 = arith.constant 3 : index
      %c0_84 = arith.constant 0 : index
      %c0_85 = arith.constant 0 : index
      %c0_86 = arith.constant 0 : index
      %95 = vector.load %arg17[%c3_83, %c0_84, %c0_85, %c0_86] : memref<4x2x8x8xf32, #tpu.memory_space<vmem>>, vector<1x2x8x8xf32>
      %96 = vector.shape_cast %95 : vector<1x2x8x8xf32> to vector<2x8x8xf32>
      %97 = vector.shape_cast %94 : vector<2x8x8xf32> to vector<1x2x8x8xf32>
      tpu.vector_store %arg17[%c3_83, %c0_84, %c0_85, %c0_86], %97 {strides = array<i32>} : memref<4x2x8x8xf32, #tpu.memory_space<vmem>>, vector<1x2x8x8xf32>,
      %cst_87 = arith.constant 0.000000e+00 : f32
      %98 = vector.broadcast %cst_87 : f32 to vector<2x1x8xf32>
      %c0_88 = arith.constant 0 : index
      %c0_89 = arith.constant 0 : index
      %c0_90 = arith.constant 0 : index
      %99 = vector.load %arg14[%c0_88, %c0_89, %c0_90] : memref<2x1x8xf32, #tpu.memory_space<vmem>>, vector<2x1x8xf32>
      tpu.vector_store %arg14[%c0_88, %c0_89, %c0_90], %98 {strides = array<i32>} : memref<2x1x8xf32, #tpu.memory_space<vmem>>, vector<2x1x8xf32>,
    } else {
    }
    %c8_i32 = arith.constant 8 : i32
    %3 = arith.muli %arg1, %c8_i32 : i32
    %4 = tpu.assume_multiple %3, 8 : i32
    %c0 = arith.constant 0 : index
    %5 = arith.index_cast %4 : i32 to index
    %c0_1 = arith.constant 0 : index
    %6 = vector.load %arg2[%c0, %5, %c0_1] : memref<2x8x32xf32, #tpu.memory_space<vmem>>, vector<2x8x32xf32>
    %7 = vector.shape_cast %6 : vector<2x8x32xf32> to vector<16x32xf32>
    %c0_2 = arith.constant 0 : index
    %c0_3 = arith.constant 0 : index
    %8 = vector.load %arg3[%c0_2, %c0_3] : memref<32x32xf32, #tpu.memory_space<vmem>>, vector<32x32xf32>
    %cst = arith.constant dense<0.000000e+00> : vector<16x32xf32>
    %9 = tpu.matmul %7, %8, %cst {dimension_numbers = #tpu.dot_dimension_numbers<[1], [0], [0], [1], [0, 0, 1, 1], [], []>} : vector<16x32xf32>, vector<32x32xf32>, vector<16x32xf32> -> vector<16x32xf32>
    %c0_4 = arith.constant 0 : index
    %c0_5 = arith.constant 0 : index
    %10 = vector.load %arg4[%c0_4, %c0_5] : memref<1x32xf32, #tpu.memory_space<vmem>>, vector<1x32xf32>
    %11 = vector.broadcast %10 : vector<1x32xf32> to vector<16x32xf32>
    %12 = arith.addf %9, %11 : vector<16x32xf32>
    %cst_6 = arith.constant 0.353553385 : f32
    %13 = vector.broadcast %cst_6 : f32 to vector<16x32xf32>
    %14 = arith.mulf %12, %13 : vector<16x32xf32>
    %15 = vector.shape_cast %14 : vector<16x32xf32> to vector<2x8x32xf32>
    %16 = vector.extract_strided_slice %15 {offsets = [0, 0, 0], sizes = [2, 8, 8], strides = [1, 1, 1]} : vector<2x8x32xf32> to vector<2x8x8xf32>
    %c0_7 = arith.constant 0 : index
    %c0_8 = arith.constant 0 : index
    %c0_9 = arith.constant 0 : index
    %c0_10 = arith.constant 0 : index
    %17 = vector.load %arg18[%c0_7, %c0_8, %c0_9, %c0_10] : memref<4x2x8x8xf32, #tpu.memory_space<vmem>>, vector<1x2x8x8xf32>
    %18 = vector.shape_cast %17 : vector<1x2x8x8xf32> to vector<2x8x8xf32>
    %19 = vector.shape_cast %16 : vector<2x8x8xf32> to vector<1x2x8x8xf32>
    tpu.vector_store %arg18[%c0_7, %c0_8, %c0_9, %c0_10], %19 {strides = array<i32>} : memref<4x2x8x8xf32, #tpu.memory_space<vmem>>, vector<1x2x8x8xf32>,
    %20 = vector.extract_strided_slice %15 {offsets = [0, 0, 8], sizes = [2, 8, 8], strides = [1, 1, 1]} : vector<2x8x32xf32> to vector<2x8x8xf32>
    %c1 = arith.constant 1 : index
    %c0_11 = arith.constant 0 : index
    %c0_12 = arith.constant 0 : index
    %c0_13 = arith.constant 0 : index
    %21 = vector.load %arg18[%c1, %c0_11, %c0_12, %c0_13] : memref<4x2x8x8xf32, #tpu.memory_space<vmem>>, vector<1x2x8x8xf32>
    %22 = vector.shape_cast %21 : vector<1x2x8x8xf32> to vector<2x8x8xf32>
    %23 = vector.shape_cast %20 : vector<2x8x8xf32> to vector<1x2x8x8xf32>
    tpu.vector_store %arg18[%c1, %c0_11, %c0_12, %c0_13], %23 {strides = array<i32>} : memref<4x2x8x8xf32, #tpu.memory_space<vmem>>, vector<1x2x8x8xf32>,
    %24 = vector.extract_strided_slice %15 {offsets = [0, 0, 16], sizes = [2, 8, 8], strides = [1, 1, 1]} : vector<2x8x32xf32> to vector<2x8x8xf32>
    %c2 = arith.constant 2 : index
    %c0_14 = arith.constant 0 : index
    %c0_15 = arith.constant 0 : index
    %c0_16 = arith.constant 0 : index
    %25 = vector.load %arg18[%c2, %c0_14, %c0_15, %c0_16] : memref<4x2x8x8xf32, #tpu.memory_space<vmem>>, vector<1x2x8x8xf32>
    %26 = vector.shape_cast %25 : vector<1x2x8x8xf32> to vector<2x8x8xf32>
    %27 = vector.shape_cast %24 : vector<2x8x8xf32> to vector<1x2x8x8xf32>
    tpu.vector_store %arg18[%c2, %c0_14, %c0_15, %c0_16], %27 {strides = array<i32>} : memref<4x2x8x8xf32, #tpu.memory_space<vmem>>, vector<1x2x8x8xf32>,
    %28 = vector.extract_strided_slice %15 {offsets = [0, 0, 24], sizes = [2, 8, 8], strides = [1, 1, 1]} : vector<2x8x32xf32> to vector<2x8x8xf32>
    %c3 = arith.constant 3 : index
    %c0_17 = arith.constant 0 : index
    %c0_18 = arith.constant 0 : index
    %c0_19 = arith.constant 0 : index
    %29 = vector.load %arg18[%c3, %c0_17, %c0_18, %c0_19] : memref<4x2x8x8xf32, #tpu.memory_space<vmem>>, vector<1x2x8x8xf32>
    %30 = vector.shape_cast %29 : vector<1x2x8x8xf32> to vector<2x8x8xf32>
    %31 = vector.shape_cast %28 : vector<2x8x8xf32> to vector<1x2x8x8xf32>
    tpu.vector_store %arg18[%c3, %c0_17, %c0_18, %c0_19], %31 {strides = array<i32>} : memref<4x2x8x8xf32, #tpu.memory_space<vmem>>, vector<1x2x8x8xf32>,
    %cst_20 = arith.constant 0.000000e+00 : f32
    %32 = vector.broadcast %cst_20 : f32 to vector<16x32xf32>
    %cst_21 = arith.constant 0.000000e+00 : f32
    %33 = vector.broadcast %cst_21 : f32 to vector<2x1x8xf32>
    %c0_i32_22 = arith.constant 0 : i32
    %c4_i32 = arith.constant 4 : i32
    %34 = arith.addi %c0_i32_22, %c4_i32 : i32
    %c1_i32 = arith.constant 1 : i32
    %35:2 = scf.for %arg19 = %c0_i32_22 to %34 step %c1_i32 iter_args(%arg20 = %32, %arg21 = %33) -> (vector<16x32xf32>, vector<2x1x8xf32>)  : i32 {
      %52 = arith.index_cast %arg19 : i32 to index
      %c0_42 = arith.constant 0 : index
      %c0_43 = arith.constant 0 : index
      %c0_44 = arith.constant 0 : index
      %53 = vector.load %arg18[%52, %c0_42, %c0_43, %c0_44] : memref<4x2x8x8xf32, #tpu.memory_space<vmem>>, vector<1x2x8x8xf32>
      %54 = vector.shape_cast %53 : vector<1x2x8x8xf32> to vector<2x8x8xf32>
      %55 = arith.index_cast %arg19 : i32 to index
      %c0_45 = arith.constant 0 : index
      %c0_46 = arith.constant 0 : index
      %c0_47 = arith.constant 0 : index
      %56 = vector.load %arg16[%55, %c0_45, %c0_46, %c0_47] : memref<4x2x8x8xf32, #tpu.memory_space<vmem>>, vector<1x2x8x8xf32>
      %57 = vector.shape_cast %56 : vector<1x2x8x8xf32> to vector<2x8x8xf32>
      %58 = arith.index_cast %arg19 : i32 to index
      %c0_48 = arith.constant 0 : index
      %c0_49 = arith.constant 0 : index
      %c0_50 = arith.constant 0 : index
      %59 = vector.load %arg17[%58, %c0_48, %c0_49, %c0_50] : memref<4x2x8x8xf32, #tpu.memory_space<vmem>>, vector<1x2x8x8xf32>
      %60 = vector.shape_cast %59 : vector<1x2x8x8xf32> to vector<2x8x8xf32>
      "tpu.trace_start"() <{level = 10 : i32, message = "bqd,bkd->bqk"}> : () -> ()
      %cst_51 = arith.constant dense<0.000000e+00> : vector<2x8x8xf32>
      %61 = tpu.matmul %54, %57, %cst_51 {dimension_numbers = #tpu.dot_dimension_numbers<[2], [2], [1], [1], [0, 0, 0, 1, 1, 1], [0], [0]>} : vector<2x8x8xf32>, vector<2x8x8xf32>, vector<2x8x8xf32> -> vector<2x8x8xf32>
      "tpu.trace_stop"() : () -> ()
      %cst_52 = arith.constant dense<0xFF800000> : vector<2x8xf32>
      %62 = vector.multi_reduction <maximumf>, %61, %cst_52 [2] : vector<2x8x8xf32> to vector<2x8xf32>
      %63 = vector.shape_cast %62 : vector<2x8xf32> to vector<2x8x1xf32>
      %64 = vector.broadcast %63 : vector<2x8x1xf32> to vector<2x8x8xf32>
      %65 = arith.subf %61, %64 : vector<2x8x8xf32>
      %66 = math.exp %65 : vector<2x8x8xf32>
      %cst_53 = arith.constant dense<0.000000e+00> : vector<2x8xf32>
      %67 = vector.multi_reduction <add>, %66, %cst_53 [2] : vector<2x8x8xf32> to vector<2x8xf32>
      %68 = vector.shape_cast %67 : vector<2x8xf32> to vector<2x8x1xf32>
      %69 = tpu.reciprocal %68 : vector<2x8x1xf32> -> vector<2x8x1xf32>
      %70 = vector.broadcast %69 : vector<2x8x1xf32> to vector<2x8x8xf32>
      %71 = arith.mulf %66, %70 : vector<2x8x8xf32>
      %c0_54 = arith.constant 0 : index
      %72 = arith.index_cast %arg19 : i32 to index
      %c0_55 = arith.constant 0 : index
      %c0_56 = arith.constant 0 : index
      %73 = vector.load %arg15[%c0_54, %72, %c0_55, %c0_56] : memref<2x4x8x8xf32, #tpu.memory_space<vmem>>, vector<2x1x8x8xf32>
      %74 = vector.shape_cast %73 : vector<2x1x8x8xf32> to vector<2x8x8xf32>
      %75 = vector.shape_cast %71 : vector<2x8x8xf32> to vector<2x1x8x8xf32>
      tpu.vector_store %arg15[%c0_54, %72, %c0_55, %c0_56], %75 {strides = array<i32>} : memref<2x4x8x8xf32, #tpu.memory_space<vmem>>, vector<2x1x8x8xf32>,
      %cst_57 = arith.constant dense<0.000000e+00> : vector<2x8xf32>
      %76 = vector.multi_reduction <add>, %71, %cst_57 [1] : vector<2x8x8xf32> to vector<2x8xf32>
      %77 = vector.shape_cast %76 : vector<2x8xf32> to vector<2x1x8xf32>
      %78 = arith.addf %arg21, %77 : vector<2x1x8xf32>
      "tpu.trace_start"() <{level = 10 : i32, message = "bqk,bkd->bqd"}> : () -> ()
      %cst_58 = arith.constant dense<0.000000e+00> : vector<2x8x8xf32>
      %79 = tpu.matmul %71, %60, %cst_58 {dimension_numbers = #tpu.dot_dimension_numbers<[2], [1], [1], [2], [0, 0, 0, 1, 1, 2], [0], [0]>} : vector<2x8x8xf32>, vector<2x8x8xf32>, vector<2x8x8xf32> -> vector<2x8x8xf32>
      "tpu.trace_stop"() : () -> ()
      %80 = vector.shape_cast %79 : vector<2x8x8xf32> to vector<16x8xf32>
      %81 = arith.index_cast %arg19 : i32 to index
      %c0_59 = arith.constant 0 : index
      %c0_60 = arith.constant 0 : index
      %82 = vector.load %arg9[%81, %c0_59, %c0_60] : memref<4x8x32xf32, #tpu.memory_space<vmem>>, vector<1x8x32xf32>
      %83 = vector.shape_cast %82 : vector<1x8x32xf32> to vector<8x32xf32>
      %cst_61 = arith.constant dense<0.000000e+00> : vector<16x32xf32>
      %84 = tpu.matmul %80, %83, %cst_61 {dimension_numbers = #tpu.dot_dimension_numbers<[1], [0], [0], [1], [0, 0, 1, 1], [], []>} : vector<16x8xf32>, vector<8x32xf32>, vector<16x32xf32> -> vector<16x32xf32>
      %85 = arith.addf %arg20, %84 : vector<16x32xf32>
      scf.yield %85, %78 : vector<16x32xf32>, vector<2x1x8xf32>
    }
    %c4_i32_23 = arith.constant 4 : i32
    %c0_24 = arith.constant 0 : index
    %c0_25 = arith.constant 0 : index
    %c0_26 = arith.constant 0 : index
    %36 = vector.load %arg14[%c0_24, %c0_25, %c0_26] : memref<2x1x8xf32, #tpu.memory_space<vmem>>, vector<2x1x8xf32>
    %37 = arith.addf %36, %35#1 : vector<2x1x8xf32>
    %c0_27 = arith.constant 0 : index
    %c0_28 = arith.constant 0 : index
    %c0_29 = arith.constant 0 : index
    %38 = vector.load %arg14[%c0_27, %c0_28, %c0_29] : memref<2x1x8xf32, #tpu.memory_space<vmem>>, vector<2x1x8xf32>
    tpu.vector_store %arg14[%c0_27, %c0_28, %c0_29], %37 {strides = array<i32>} : memref<2x1x8xf32, #tpu.memory_space<vmem>>, vector<2x1x8xf32>,
    %c0_30 = arith.constant 0 : index
    %c0_31 = arith.constant 0 : index
    %39 = vector.load %arg10[%c0_30, %c0_31] : memref<1x32xf32, #tpu.memory_space<vmem>>, vector<1x32xf32>
    %40 = vector.broadcast %39 : vector<1x32xf32> to vector<16x32xf32>
    %41 = arith.addf %35#0, %40 : vector<16x32xf32>
    %c0_32 = arith.constant 0 : index
    %c0_33 = arith.constant 0 : index
    %42 = vector.load %arg11[%c0_32, %c0_33] : memref<32x32xf32, #tpu.memory_space<vmem>>, vector<32x32xf32>
    %cst_34 = arith.constant dense<0.000000e+00> : vector<16x32xf32>
    %43 = tpu.matmul %41, %42, %cst_34 {dimension_numbers = #tpu.dot_dimension_numbers<[1], [0], [0], [1], [0, 0, 1, 1], [], []>} : vector<16x32xf32>, vector<32x32xf32>, vector<16x32xf32> -> vector<16x32xf32>
    %c0_35 = arith.constant 0 : index
    %c0_36 = arith.constant 0 : index
    %44 = vector.load %arg12[%c0_35, %c0_36] : memref<1x32xf32, #tpu.memory_space<vmem>>, vector<1x32xf32>
    %45 = vector.broadcast %44 : vector<1x32xf32> to vector<16x32xf32>
    %46 = arith.addf %43, %45 : vector<16x32xf32>
    %47 = vector.shape_cast %46 : vector<16x32xf32> to vector<2x8x32xf32>
    %c0_37 = arith.constant 0 : index
    %c0_38 = arith.constant 0 : index
    %c0_39 = arith.constant 0 : index
    %48 = vector.load %arg13[%c0_37, %c0_38, %c0_39] : memref<2x8x32xf32, #tpu.memory_space<vmem>>, vector<2x8x32xf32>
    tpu.vector_store %arg13[%c0_37, %c0_38, %c0_39], %47 {strides = array<i32>} : memref<2x8x32xf32, #tpu.memory_space<vmem>>, vector<2x8x32xf32>,
    %c0_i32_40 = arith.constant 0 : i32
    %49 = arith.cmpi eq, %arg1, %c0_i32_40 : i32
    %50 = arith.extui %49 : i1 to i32
    %c0_i32_41 = arith.constant 0 : i32
    %51 = arith.cmpi ne, %50, %c0_i32_41 : i32
    scf.if %51 {
      %c0_42 = arith.constant 0 : index
      %c0_43 = arith.constant 0 : index
      %c0_44 = arith.constant 0 : index
      %52 = vector.load %arg14[%c0_42, %c0_43, %c0_44] : memref<2x1x8xf32, #tpu.memory_space<vmem>>, vector<2x1x8xf32>
      %cst_45 = arith.constant 1.250000e-01 : f32
      %53 = vector.broadcast %cst_45 : f32 to vector<2x1x8xf32>
      %54 = arith.mulf %52, %53 : vector<2x1x8xf32>
      %cst_46 = arith.constant dense<0x7F800000> : vector<2x1xf32>
      %55 = vector.multi_reduction <minimumf>, %54, %cst_46 [2] : vector<2x1x8xf32> to vector<2x1xf32>
      %56 = vector.shape_cast %55 : vector<2x1xf32> to vector<2x1x1xf32>
      %cst_47 = arith.constant dense<0xFF800000> : vector<2x1xf32>
      %57 = vector.multi_reduction <maximumf>, %54, %cst_47 [2] : vector<2x1x8xf32> to vector<2x1xf32>
      %58 = vector.shape_cast %57 : vector<2x1xf32> to vector<2x1x1xf32>
      %59 = vector.broadcast %56 : vector<2x1x1xf32> to vector<2x1x8xf32>
      %60 = arith.subf %54, %59 : vector<2x1x8xf32>
      %61 = arith.subf %58, %56 : vector<2x1x1xf32>
      %cst_48 = arith.constant 9.99999971E-10 : f32
      %62 = vector.broadcast %cst_48 : f32 to vector<2x1x1xf32>
      %63 = arith.addf %61, %62 : vector<2x1x1xf32>
      %64 = vector.broadcast %63 : vector<2x1x1xf32> to vector<2x1x8xf32>
      %65 = arith.divf %60, %64 : vector<2x1x8xf32>
      %c0_49 = arith.constant 0 : index
      %c0_50 = arith.constant 0 : index
      %c0_51 = arith.constant 0 : index
      %66 = vector.load %arg14[%c0_49, %c0_50, %c0_51] : memref<2x1x8xf32, #tpu.memory_space<vmem>>, vector<2x1x8xf32>
      tpu.vector_store %arg14[%c0_49, %c0_50, %c0_51], %65 {strides = array<i32>} : memref<2x1x8xf32, #tpu.memory_space<vmem>>, vector<2x1x8xf32>,
    } else {
    }
    return
  }
  func.func @transform_0(%arg0: i32, %arg1: i32) -> (i32, i32, i32) {
    %c0_i32 = arith.constant 0 : i32
    %c0_i32_0 = arith.constant 0 : i32
    %c0_i32_1 = arith.constant 0 : i32
    return %arg0, %c0_i32, %c0_i32_0 : i32, i32, i32
  }
  func.func @transform_1(%arg0: i32, %arg1: i32) -> (i32, i32) {
    %c0_i32 = arith.constant 0 : i32
    %c0_i32_0 = arith.constant 0 : i32
    %c0_i32_1 = arith.constant 0 : i32
    return %c0_i32, %c0_i32_0 : i32, i32
  }
  func.func @transform_2(%arg0: i32, %arg1: i32) -> (i32, i32) {
    %c0_i32 = arith.constant 0 : i32
    %c0_i32_0 = arith.constant 0 : i32
    %c0_i32_1 = arith.constant 0 : i32
    return %c0_i32, %c0_i32_0 : i32, i32
  }
  func.func @transform_3(%arg0: i32, %arg1: i32) -> (i32, i32) {
    %c0_i32 = arith.constant 0 : i32
    %c0_i32_0 = arith.constant 0 : i32
    %c0_i32_1 = arith.constant 0 : i32
    return %c0_i32, %c0_i32_0 : i32, i32
  }
  func.func @transform_4(%arg0: i32, %arg1: i32) -> (i32, i32) {
    %c0_i32 = arith.constant 0 : i32
    %c0_i32_0 = arith.constant 0 : i32
    %c0_i32_1 = arith.constant 0 : i32
    return %c0_i32, %c0_i32_0 : i32, i32
  }
  func.func @transform_5(%arg0: i32, %arg1: i32) -> (i32, i32) {
    %c0_i32 = arith.constant 0 : i32
    %c0_i32_0 = arith.constant 0 : i32
    %c0_i32_1 = arith.constant 0 : i32
    return %c0_i32, %c0_i32_0 : i32, i32
  }
  func.func @transform_6(%arg0: i32, %arg1: i32) -> (i32, i32) {
    %c0_i32 = arith.constant 0 : i32
    %c0_i32_0 = arith.constant 0 : i32
    %c0_i32_1 = arith.constant 0 : i32
    return %c0_i32, %c0_i32_0 : i32, i32
  }
  func.func @transform_7(%arg0: i32, %arg1: i32) -> (i32, i32, i32) {
    %c0_i32 = arith.constant 0 : i32
    %c0_i32_0 = arith.constant 0 : i32
    %c0_i32_1 = arith.constant 0 : i32
    %c0_i32_2 = arith.constant 0 : i32
    return %c0_i32, %c0_i32_0, %c0_i32_1 : i32, i32, i32
  }
  func.func @transform_8(%arg0: i32, %arg1: i32) -> (i32, i32) {
    %c0_i32 = arith.constant 0 : i32
    %c0_i32_0 = arith.constant 0 : i32
    %c0_i32_1 = arith.constant 0 : i32
    return %c0_i32, %c0_i32_0 : i32, i32
  }
  func.func @transform_9(%arg0: i32, %arg1: i32) -> (i32, i32) {
    %c0_i32 = arith.constant 0 : i32
    %c0_i32_0 = arith.constant 0 : i32
    %c0_i32_1 = arith.constant 0 : i32
    return %c0_i32, %c0_i32_0 : i32, i32
  }
  func.func @transform_10(%arg0: i32, %arg1: i32) -> (i32, i32) {
    %c0_i32 = arith.constant 0 : i32
    %c0_i32_0 = arith.constant 0 : i32
    %c0_i32_1 = arith.constant 0 : i32
    return %c0_i32, %c0_i32_0 : i32, i32
  }
  func.func @transform_11(%arg0: i32, %arg1: i32) -> (i32, i32, i32) {
    %c0_i32 = arith.constant 0 : i32
    %c0_i32_0 = arith.constant 0 : i32
    return %arg0, %arg1, %c0_i32 : i32, i32, i32
  }
  func.func @transform_12(%arg0: i32, %arg1: i32) -> (i32, i32, i32) {
    %c0_i32 = arith.constant 0 : i32
    %c0_i32_0 = arith.constant 0 : i32
    %c0_i32_1 = arith.constant 0 : i32
    return %arg0, %c0_i32, %c0_i32_0 : i32, i32, i32
  }
  func.func @transform_13(%arg0: i32, %arg1: i32) -> (i32, i32, i32, i32) {
    %c0_i32 = arith.constant 0 : i32
    %c0_i32_0 = arith.constant 0 : i32
    %c0_i32_1 = arith.constant 0 : i32
    return %arg0, %c0_i32, %arg1, %c0_i32_0 : i32, i32, i32, i32
  }
}

</mosaic_0001>

<llo_original>
// kernel: tpu_custom_call.1
$region0: #{tpu_custom_call.1}
  #allocation0 [shape = 'u32[]', space=smem, size = 0x4, offset = 0x4, fixed_abs, tag = 'smem constant byte address 0x4 - core index']
  #allocation1 [shape = 'u32[144,128]{1,0:T(1,128)}', space=vmem, size = 0x12000, scoped, tag = 'internal scratch']
  #allocation2 [shape = 'f32[4,2,8,8]{3,2,1,0:T(8,128)}', space=vmem, size = 0x8000, scoped, tag = 'scratch operand']
  #allocation3 [shape = 'f32[4,2,8,8]{3,2,1,0:T(8,128)}', space=vmem, size = 0x8000, scoped, tag = 'scratch operand']
  #allocation4 [shape = 'f32[4,2,8,8]{3,2,1,0:T(8,128)}', space=vmem, size = 0x8000, scoped, tag = 'scratch operand']
  %s0 = inlined_call_operand.hbm [shape: f32[2,8,32], index: 0, kind: input, shape index: {}]
  %s1 = inlined_call_operand.hbm [shape: f32[32,32], index: 1, kind: input, shape index: {}]
  %s2 = inlined_call_operand.vmem [shape: f32[1,32], index: 2, kind: input, shape index: {}]
  %s3 = inlined_call_operand.hbm [shape: f32[32,32], index: 3, kind: input, shape index: {}]
  %s4 = inlined_call_operand.vmem [shape: f32[1,32], index: 4, kind: input, shape index: {}]
  %s5 = inlined_call_operand.hbm [shape: f32[32,32], index: 5, kind: input, shape index: {}]
  %s6 = inlined_call_operand.hbm [shape: f32[1,32], index: 6, kind: input, shape index: {}]
  %s7 = inlined_call_operand.hbm [shape: f32[4,8,32], index: 7, kind: input, shape index: {}]
  %s8 = inlined_call_operand.hbm [shape: f32[1,32], index: 8, kind: input, shape index: {}]
  %s9 = inlined_call_operand.vmem [shape: f32[32,32], index: 9, kind: input, shape index: {}]
  %s10 = inlined_call_operand.vmem [shape: f32[1,32], index: 10, kind: input, shape index: {}]
  %s11 = inlined_call_operand.hbm [shape: f32[2,8,32], index: 11, kind: output, shape index: {0}]
  %s12 = inlined_call_operand.hbm [shape: f32[2,1,8], index: 12, kind: output, shape index: {1}]
  %s13 = inlined_call_operand.hbm [shape: f32[2,4,8,8], index: 13, kind: output, shape index: {2}]
  %14 = xla_tuple %s11, %s12, %s13
  %s15 = sld [smem:[#allocation0]]
  $region113: #{tpu_custom_call.1} parent=0
    _
  %s17 = ssub.s32 1, %s15
  %s18 = scalar_select 0, %s17, %s15
  $region1: #{tpu_custom_call.1} parent=0
    #allocation5 [shape = 'u8[8192]{0}', space=vmem, size = 0x2000, scoped, tag = 'input window, operand 0, single buffered']
    #allocation6 [shape = 's32[1]{0}', space=sflag, size = 0x4, scoped, tag = 'scoped memory for tpu_custom_call.1']
    #allocation7 [shape = 's32[1]{0}', space=sflag, size = 0x4, scoped, tag = 'scoped memory for tpu_custom_call.1']
    #allocation8 [shape = 'u8[16384]{0}', space=vmem, size = 0x4000, scoped, tag = 'input window, operand 1, single buffered']
    #allocation9 [shape = 's32[1]{0}', space=sflag, size = 0x4, scoped, tag = 'scoped memory for tpu_custom_call.1']
    #allocation10 [shape = 'u8[16384]{0}', space=vmem, size = 0x4000, scoped, tag = 'input window, operand 3, single buffered']
    #allocation11 [shape = 'u8[16384]{0}', space=vmem, size = 0x4000, scoped, tag = 'input window, operand 5, single buffered']
    #allocation12 [shape = 's32[1]{0}', space=sflag, size = 0x4, scoped, tag = 'scoped memory for tpu_custom_call.1']
    #allocation13 [shape = 'u8[512]{0}', space=vmem, size = 0x400, scoped, tag = 'input window, operand 6, single buffered']
    #allocation14 [shape = 'u8[16384]{0}', space=vmem, size = 0x4000, scoped, tag = 'input window, operand 7, single buffered']
    #allocation15 [shape = 's32[1]{0}', space=sflag, size = 0x4, scoped, tag = 'scoped memory for tpu_custom_call.1']
    #allocation16 [shape = 'u8[512]{0}', space=vmem, size = 0x400, scoped, tag = 'input window, operand 8, single buffered']
    #allocation17 [shape = 'u8[8192]{0}', space=vmem, size = 0x2000, scoped, tag = 'output window, operand 0, single buffered']
    #allocation18 [shape = 'u8[1024]{0}', space=vmem, size = 0x400, scoped, tag = 'output window, operand 1, single buffered']
    #allocation19 [shape = 's32[1]{0}', space=sflag, size = 0x4, scoped, tag = 'scoped memory for tpu_custom_call.1']
    #allocation20 [shape = 'u8[32768]{0}', space=vmem, size = 0x8000, scoped, tag = 'output window, operand 2, single buffered']
    %19 = vsyncpa [#allocation6], 0
    %20 = vsyncpa [#allocation9], 0
    %21 = vsyncpa [#allocation12], 0
    %22 = vsyncpa [#allocation15], 0
    %23 = vsyncpa [#allocation7], 0
    %24 = vsyncpa [#allocation19], 0
    // Predicated region
    $region2: #{tpu_custom_call.1} parent=1 // pred_check
      _
    $region3: #{tpu_custom_call.1} parent=1 // pred_check_branch
      %26 = sbr.rel (0) target = $region5
    $region4: #{tpu_custom_call.1} parent=1 // pred_region
      %s28 = ssub.s32 256, 256
      %29 = vsyncadd [#allocation6], %s28
      %s30 = sshll.u32 [#allocation5], 4
      %s31 = int_to_ptr.vmem [resolvable:$true] %s30
      %36 = dma.hbm_to_vmem [thread:$0]  %s0, 256, %s31, [#allocation6], 128, 128, 8
    $region5: #{tpu_custom_call.1} parent=1 // pred_fallthru
      _
    // Predicated region
    $region6: #{tpu_custom_call.1} parent=1 // pred_check
      _
    $region7: #{tpu_custom_call.1} parent=1 // pred_check_branch
      %38 = sbr.rel (0) target = $region9
    $region8: #{tpu_custom_call.1} parent=1 // pred_region
      %s40 = ssub.s32 512, 512
      %41 = vsyncadd [#allocation9], %s40
      %s42 = sshll.u32 [#allocation8], 4
      %s43 = int_to_ptr.vmem [resolvable:$true] %s42
      %48 = dma.hbm_to_vmem [thread:$0]  %s1, 512, %s43, [#allocation9], 128, 128, 8
    $region9: #{tpu_custom_call.1} parent=1 // pred_fallthru
      _
    // Predicated region
    $region10: #{tpu_custom_call.1} parent=1 // pred_check
      _
    $region11: #{tpu_custom_call.1} parent=1 // pred_check_branch
      %50 = sbr.rel (0) target = $region13
    $region12: #{tpu_custom_call.1} parent=1 // pred_region
      _
    $region13: #{tpu_custom_call.1} parent=1 // pred_fallthru
      _
    // Predicated region
    $region14: #{tpu_custom_call.1} parent=1 // pred_check
      _
    $region15: #{tpu_custom_call.1} parent=1 // pred_check_branch
      %52 = sbr.rel (0) target = $region17
    $region16: #{tpu_custom_call.1} parent=1 // pred_region
      %s54 = ssub.s32 512, 512
      %55 = vsyncadd [#allocation9], %s54
      %s56 = sshll.u32 [#allocation10], 4
      %s57 = int_to_ptr.vmem [resolvable:$true] %s56
      %62 = dma.hbm_to_vmem [thread:$0]  %s3, 512, %s57, [#allocation9], 128, 128, 8
    $region17: #{tpu_custom_call.1} parent=1 // pred_fallthru
      _
    // Predicated region
    $region18: #{tpu_custom_call.1} parent=1 // pred_check
      _
    $region19: #{tpu_custom_call.1} parent=1 // pred_check_branch
      %64 = sbr.rel (0) target = $region21
    $region20: #{tpu_custom_call.1} parent=1 // pred_region
      _
    $region21: #{tpu_custom_call.1} parent=1 // pred_fallthru
      _
    // Predicated region
    $region22: #{tpu_custom_call.1} parent=1 // pred_check
      _
    $region23: #{tpu_custom_call.1} parent=1 // pred_check_branch
      %66 = sbr.rel (0) target = $region25
    $region24: #{tpu_custom_call.1} parent=1 // pred_region
      %s68 = ssub.s32 512, 512
      %69 = vsyncadd [#allocation12], %s68
      %s70 = sshll.u32 [#allocation11], 4
      %s71 = int_to_ptr.vmem [resolvable:$true] %s70
      %76 = dma.hbm_to_vmem [thread:$0]  %s5, 512, %s71, [#allocation12], 128, 128, 8
    $region25: #{tpu_custom_call.1} parent=1 // pred_fallthru
      _
    // Predicated region
    $region26: #{tpu_custom_call.1} parent=1 // pred_check
      _
    $region27: #{tpu_custom_call.1} parent=1 // pred_check_branch
      %78 = sbr.rel (0) target = $region29
    $region28: #{tpu_custom_call.1} parent=1 // pred_region
      %s80 = ssub.s32 16, 16
      %81 = vsyncadd [#allocation12], %s80
      %s83 = sshll.u32 [#allocation13], 4
      %s84 = int_to_ptr.vmem [resolvable:$true] %s83
      %86 = dma.hbm_to_vmem [thread:$0]  %s6, 16, %s84, [#allocation12]
    $region29: #{tpu_custom_call.1} parent=1 // pred_fallthru
      _
    // Predicated region
    $region30: #{tpu_custom_call.1} parent=1 // pred_check
      _
    $region31: #{tpu_custom_call.1} parent=1 // pred_check_branch
      %88 = sbr.rel (0) target = $region33
    $region32: #{tpu_custom_call.1} parent=1 // pred_region
      %s90 = ssub.s32 512, 512
      %91 = vsyncadd [#allocation15], %s90
      %s92 = sshll.u32 [#allocation14], 4
      %s93 = int_to_ptr.vmem [resolvable:$true] %s92
      %98 = dma.hbm_to_vmem [thread:$0]  %s7, 512, %s93, [#allocation15], 128, 128, 8
    $region33: #{tpu_custom_call.1} parent=1 // pred_fallthru
      _
    // Predicated region
    $region34: #{tpu_custom_call.1} parent=1 // pred_check
      _
    $region35: #{tpu_custom_call.1} parent=1 // pred_check_branch
      %100 = sbr.rel (0) target = $region37
    $region36: #{tpu_custom_call.1} parent=1 // pred_region
      %s102 = ssub.s32 16, 16
      %103 = vsyncadd [#allocation15], %s102
      %s105 = sshll.u32 [#allocation16], 4
      %s106 = int_to_ptr.vmem [resolvable:$true] %s105
      %108 = dma.hbm_to_vmem [thread:$0]  %s8, 16, %s106, [#allocation15]
    $region37: #{tpu_custom_call.1} parent=1 // pred_fallthru
      _
    // Predicated region
    $region38: #{tpu_custom_call.1} parent=1 // pred_check
      _
    $region39: #{tpu_custom_call.1} parent=1 // pred_check_branch
      %110 = sbr.rel (0) target = $region41
    $region40: #{tpu_custom_call.1} parent=1 // pred_region
      _
    $region41: #{tpu_custom_call.1} parent=1 // pred_fallthru
      _
    // Predicated region
    $region42: #{tpu_custom_call.1} parent=1 // pred_check
      _
    $region43: #{tpu_custom_call.1} parent=1 // pred_check_branch
      %112 = sbr.rel (0) target = $region45
    $region44: #{tpu_custom_call.1} parent=1 // pred_region
      _
    $region45: #{tpu_custom_call.1} parent=1 // pred_fallthru
      _
    // Predicated region
    $region46: #{tpu_custom_call.1} parent=1 // pred_check
      _
    $region47: #{tpu_custom_call.1} parent=1 // pred_check_branch
      %114 = sbr.rel (0) target = $region49
    $region48: #{tpu_custom_call.1} parent=1 // pred_region
      %115 = dma.done [#allocation6], 256
    $region49: #{tpu_custom_call.1} parent=1 // pred_fallthru
      _
    // Predicated region
    $region50: #{tpu_custom_call.1} parent=1 // pred_check
      _
    $region51: #{tpu_custom_call.1} parent=1 // pred_check_branch
      %117 = sbr.rel (0) target = $region53
    $region52: #{tpu_custom_call.1} parent=1 // pred_region
      %118 = dma.done [#allocation9], 512
    $region53: #{tpu_custom_call.1} parent=1 // pred_fallthru
      _
    // Predicated region
    $region54: #{tpu_custom_call.1} parent=1 // pred_check
      _
    $region55: #{tpu_custom_call.1} parent=1 // pred_check_branch
      %120 = sbr.rel (0) target = $region57
    $region56: #{tpu_custom_call.1} parent=1 // pred_region
      %121 = dma.done [#allocation9], 512
    $region57: #{tpu_custom_call.1} parent=1 // pred_fallthru
      _
    // Predicated region
    $region58: #{tpu_custom_call.1} parent=1 // pred_check
      _
    $region59: #{tpu_custom_call.1} parent=1 // pred_check_branch
      %123 = sbr.rel (0) target = $region61
    $region60: #{tpu_custom_call.1} parent=1 // pred_region
      %124 = dma.done [#allocation12], 512
    $region61: #{tpu_custom_call.1} parent=1 // pred_fallthru
      _
    // Predicated region
    $region62: #{tpu_custom_call.1} parent=1 // pred_check
      _
    $region63: #{tpu_custom_call.1} parent=1 // pred_check_branch
      %126 = sbr.rel (0) target = $region65
    $region64: #{tpu_custom_call.1} parent=1 // pred_region
      %127 = dma.done [#allocation12], 16
    $region65: #{tpu_custom_call.1} parent=1 // pred_fallthru
      _
    // Predicated region
    $region66: #{tpu_custom_call.1} parent=1 // pred_check
      _
    $region67: #{tpu_custom_call.1} parent=1 // pred_check_branch
      %129 = sbr.rel (0) target = $region69
    $region68: #{tpu_custom_call.1} parent=1 // pred_region
      %130 = dma.done [#allocation15], 512
    $region69: #{tpu_custom_call.1} parent=1 // pred_fallthru
      _
    // Predicated region
    $region70: #{tpu_custom_call.1} parent=1 // pred_check
      _
    $region71: #{tpu_custom_call.1} parent=1 // pred_check_branch
      %132 = sbr.rel (0) target = $region73
    $region72: #{tpu_custom_call.1} parent=1 // pred_region
      %133 = dma.done [#allocation15], 16
    $region73: #{tpu_custom_call.1} parent=1 // pred_fallthru
      _
    %p134 = scmp.eq.s32.totalorder 0, 0
    // Predicated region
    $region74: #{tpu_custom_call.1} parent=1 // pred_check
      %p135 = pneg %p134
    $region75: #{tpu_custom_call.1} parent=1 // pred_check_branch
      %137 = sbr.rel (%p135) target = $region77
    $region76: #{tpu_custom_call.1} parent=1 // pred_region
      %v138 = vld [vmem:[#allocation5] sm:$0xff]
      %v139 = vld [vmem:[#allocation5 + $0x8] sm:$0xff]
      %v140 = vld [vmem:[#allocation10] sm:$0xff]
      %v141 = vld [vmem:[#allocation10 + $0x8] sm:$0xff]
      %v142 = vld [vmem:[#allocation10 + $0x10] sm:$0xff]
      %v143 = vld [vmem:[#allocation10 + $0x18] sm:$0xff]
      %v144 = vld [vmem:[%s4] sm:$0x1]
      %v146 = vlaneseq
      %v147 = vshrl.u32 %v146, 7
      %v148 = vsub.s32 0, %v147
      %v149 = vrot.slane %v144, %v148
      %vm151 = vcmask 261120
      %v153 = vsel %vm151, %v138, 0
      %v156 = vsel %vm151, %v139, 0
      %158 = vmatprep.subr.mxu0 0.0
      %159 = vmatpush1.msra.mxu0 %v140
      %160 = vmatprep.subr.mxu0 0.0
      %161 = vmatpush1.msra.mxu0 %v141
      %162 = vmatprep.subr.mxu0 0.0
      %163 = vmatpush1.msra.mxu0 %v142
      %164 = vmatprep.subr.mxu0 0.0
      %165 = vmatpush1.msra.mxu0 %v143
      %166 = vmatprep.subr.mxu0 0.0
      %167 = vmatpush1.msra.mxu0 0.0
      %168 = vmatprep.subr.mxu0 0.0
      %169 = vmatpush1.msra.mxu0 0.0
      %170 = vmatprep.subr.mxu0 0.0
      %171 = vmatpush1.msra.mxu0 0.0
      %172 = vmatprep.subr.mxu0 0.0
      %173 = vmatpush1.msra.mxu0 0.0
      %174 = vmatprep.subr.mxu0 0.0
      %175 = vmatpush1.msra.mxu0 0.0
      %176 = vmatprep.subr.mxu0 0.0
      %177 = vmatpush1.msra.mxu0 0.0
      %178 = vmatprep.subr.mxu0 0.0
      %179 = vmatpush1.msra.mxu0 0.0
      %180 = vmatprep.subr.mxu0 0.0
      %181 = vmatpush1.msra.mxu0 0.0
      %182 = vmatprep.subr.mxu0 0.0
      %183 = vmatpush1.msra.mxu0 0.0
      %184 = vmatprep.subr.mxu0 0.0
      %185 = vmatpush1.msra.mxu0 0.0
      %186 = vmatprep.subr.mxu0 0.0
      %187 = vmatpush1.msra.mxu0 0.0
      %188 = vmatprep.subr.mxu0 0.0
      %189 = vmatpush1.msra.mxu0 0.0
      %190 = vmatprep.subr.mxu0 0.0
      %191 = vmatpush1.msra.mxu0 0.0
      %192 = vmatprep.subr.mxu0 0.0
      %193 = vmatpush1.msra.mxu0 0.0
      %194 = vmatprep.subr.mxu0 0.0
      %195 = vmatpush1.msra.mxu0 0.0
      %196 = vmatprep.subr.mxu0 0.0
      %197 = vmatpush1.msra.mxu0 0.0
      %198 = vmatprep.subr.mxu0 0.0
      %199 = vmatpush1.msra.mxu0 0.0
      %200 = vmatprep.subr.mxu0 0.0
      %201 = vmatpush1.msra.mxu0 0.0
      %202 = vmatprep.subr.mxu0 0.0
      %203 = vmatpush1.msra.mxu0 0.0
      %204 = vmatprep.subr.mxu0 0.0
      %205 = vmatpush1.msra.mxu0 0.0
      %206 = vmatprep.subr.mxu0 0.0
      %207 = vmatpush1.msra.mxu0 0.0
      %208 = vmatprep.subr.mxu0 0.0
      %209 = vmatpush1.msra.mxu0 0.0
      %210 = vmatprep.subr.mxu0 0.0
      %211 = vmatpush1.msra.mxu0 0.0
      %212 = vmatprep.subr.mxu0 0.0
      %213 = vmatpush1.msra.mxu0 0.0
      %214 = vmatprep.subr.mxu0 0.0
      %215 = vmatpush1.msra.mxu0 0.0
      %216 = vmatprep.subr.mxu0 0.0
      %217 = vmatpush1.msra.mxu0 0.0
      %218 = vmatprep.subr.mxu0 0.0
      %219 = vmatpush1.msra.mxu0 0.0
      %220 = vmatprep.subr.mxu0 0.0
      %221 = vmatpush1.msra.mxu0 0.0
      %222 = vmatprep.mubr.f32.mxu0 0.0
      %223 = vmatmul.mubr.f32.gmra.mrb[0].mxu0 %v153
      %v224 = vpop.f32.mrb[0].mxu0
      %v225 = vadd.f32 %v149, %v224
      %v226 = vpop.f32.mrb[0].mxu0
      %227 = vmatprep.mubr.f32.mxu0 0.0
      %228 = vmatmul.mubr.f32.gmra.mrb[0].mxu0 %v156
      %v229 = vpop.f32.mrb[0].mxu0
      %v230 = vadd.f32 %v149, %v229
      %v231 = vpop.f32.mrb[0].mxu0
      %232 = vdwg.mxu0
      %v233 = vld [vmem:[#allocation11] sm:$0xff]
      %v234 = vld [vmem:[#allocation11 + $0x8] sm:$0xff]
      %v235 = vld [vmem:[#allocation11 + $0x10] sm:$0xff]
      %v236 = vld [vmem:[#allocation11 + $0x18] sm:$0xff]
      %v237 = vld [vmem:[#allocation13] sm:$0x1]
      %v239 = vlaneseq
      %v240 = vshrl.u32 %v239, 7
      %v241 = vsub.s32 0, %v240
      %v242 = vrot.slane %v237, %v241
      %244 = vmatprep.subr.mxu0 0.0
      %245 = vmatpush1.msra.mxu0 %v233
      %246 = vmatprep.subr.mxu0 0.0
      %247 = vmatpush1.msra.mxu0 %v234
      %248 = vmatprep.subr.mxu0 0.0
      %249 = vmatpush1.msra.mxu0 %v235
      %250 = vmatprep.subr.mxu0 0.0
      %251 = vmatpush1.msra.mxu0 %v236
      %252 = vmatprep.subr.mxu0 0.0
      %253 = vmatpush1.msra.mxu0 0.0
      %254 = vmatprep.subr.mxu0 0.0
      %255 = vmatpush1.msra.mxu0 0.0
      %256 = vmatprep.subr.mxu0 0.0
      %257 = vmatpush1.msra.mxu0 0.0
      %258 = vmatprep.subr.mxu0 0.0
      %259 = vmatpush1.msra.mxu0 0.0
      %260 = vmatprep.subr.mxu0 0.0
      %261 = vmatpush1.msra.mxu0 0.0
      %262 = vmatprep.subr.mxu0 0.0
      %263 = vmatpush1.msra.mxu0 0.0
      %264 = vmatprep.subr.mxu0 0.0
      %265 = vmatpush1.msra.mxu0 0.0
      %266 = vmatprep.subr.mxu0 0.0
      %267 = vmatpush1.msra.mxu0 0.0
      %268 = vmatprep.subr.mxu0 0.0
      %269 = vmatpush1.msra.mxu0 0.0
      %270 = vmatprep.subr.mxu0 0.0
      %271 = vmatpush1.msra.mxu0 0.0
      %272 = vmatprep.subr.mxu0 0.0
      %273 = vmatpush1.msra.mxu0 0.0
      %274 = vmatprep.subr.mxu0 0.0
      %275 = vmatpush1.msra.mxu0 0.0
      %276 = vmatprep.subr.mxu0 0.0
      %277 = vmatpush1.msra.mxu0 0.0
      %278 = vmatprep.subr.mxu0 0.0
      %279 = vmatpush1.msra.mxu0 0.0
      %280 = vmatprep.subr.mxu0 0.0
      %281 = vmatpush1.msra.mxu0 0.0
      %282 = vmatprep.subr.mxu0 0.0
      %283 = vmatpush1.msra.mxu0 0.0
      %284 = vmatprep.subr.mxu0 0.0
      %285 = vmatpush1.msra.mxu0 0.0
      %286 = vmatprep.subr.mxu0 0.0
      %287 = vmatpush1.msra.mxu0 0.0
      %288 = vmatprep.subr.mxu0 0.0
      %289 = vmatpush1.msra.mxu0 0.0
      %290 = vmatprep.subr.mxu0 0.0
      %291 = vmatpush1.msra.mxu0 0.0
      %292 = vmatprep.subr.mxu0 0.0
      %293 = vmatpush1.msra.mxu0 0.0
      %294 = vmatprep.subr.mxu0 0.0
      %295 = vmatpush1.msra.mxu0 0.0
      %296 = vmatprep.subr.mxu0 0.0
      %297 = vmatpush1.msra.mxu0 0.0
      %298 = vmatprep.subr.mxu0 0.0
      %299 = vmatpush1.msra.mxu0 0.0
      %300 = vmatprep.subr.mxu0 0.0
      %301 = vmatpush1.msra.mxu0 0.0
      %302 = vmatprep.subr.mxu0 0.0
      %303 = vmatpush1.msra.mxu0 0.0
      %304 = vmatprep.subr.mxu0 0.0
      %305 = vmatpush1.msra.mxu0 0.0
      %306 = vmatprep.subr.mxu0 0.0
      %307 = vmatpush1.msra.mxu0 0.0
      %308 = vmatprep.mubr.f32.mxu0 0.0
      %309 = vmatmul.mubr.f32.gmra.mrb[0].mxu0 %v153
      %v310 = vpop.f32.mrb[0].mxu0
      %v311 = vadd.f32 %v242, %v310
      %v312 = vpop.f32.mrb[0].mxu0
      %313 = vmatprep.mubr.f32.mxu0 0.0
      %314 = vmatmul.mubr.f32.gmra.mrb[0].mxu0 %v156
      %v315 = vpop.f32.mrb[0].mxu0
      %v316 = vadd.f32 %v242, %v315
      %v317 = vpop.f32.mrb[0].mxu0
      %318 = vdwg.mxu0
      %vm319 = vcmask 64512
      %320 = vst.msk [vmem:[#allocation2] sm:$0xff] %vm319, %v225
      %321 = vst.msk [vmem:[#allocation2 + $0x8] sm:$0xff] %vm319, %v230
      %322 = vst.msk [vmem:[#allocation3] sm:$0xff] %vm319, %v311
      %323 = vst.msk [vmem:[#allocation3 + $0x8] sm:$0xff] %vm319, %v316
      %326 = vrot.lane.b32.xlu0 %v225, 120
      %v327 = vpop.permute.xlu0 %326
      %328 = vrot.lane.b32.xlu0 %v230, 120
      %v329 = vpop.permute.xlu0 %328
      %s332 = scalar_lea.vmem [#allocation2], 16
      %333 = vst.msk [vmem:[%s332] sm:$0xff] %vm319, %v327
      %334 = vst.msk [vmem:[%s332 + $0x8] sm:$0xff] %vm319, %v329
      %337 = vrot.lane.b32.xlu0 %v311, 120
      %v338 = vpop.permute.xlu0 %337
      %339 = vrot.lane.b32.xlu0 %v316, 120
      %v340 = vpop.permute.xlu0 %339
      %s343 = scalar_lea.vmem [#allocation3], 16
      %344 = vst.msk [vmem:[%s343] sm:$0xff] %vm319, %v338
      %345 = vst.msk [vmem:[%s343 + $0x8] sm:$0xff] %vm319, %v340
      %346 = vrot.lane.b32.xlu0 %v225, 112
      %v347 = vpop.permute.xlu0 %346
      %348 = vrot.lane.b32.xlu0 %v230, 112
      %v349 = vpop.permute.xlu0 %348
      %s352 = scalar_lea.vmem [#allocation2], 32
      %353 = vst.msk [vmem:[%s352] sm:$0xff] %vm319, %v347
      %354 = vst.msk [vmem:[%s352 + $0x8] sm:$0xff] %vm319, %v349
      %355 = vrot.lane.b32.xlu0 %v311, 112
      %v356 = vpop.permute.xlu0 %355
      %357 = vrot.lane.b32.xlu0 %v316, 112
      %v358 = vpop.permute.xlu0 %357
      %s361 = scalar_lea.vmem [#allocation3], 32
      %362 = vst.msk [vmem:[%s361] sm:$0xff] %vm319, %v356
      %363 = vst.msk [vmem:[%s361 + $0x8] sm:$0xff] %vm319, %v358
      %364 = vrot.lane.b32.xlu0 %v225, 104
      %v365 = vpop.permute.xlu0 %364
      %366 = vrot.lane.b32.xlu0 %v230, 104
      %v367 = vpop.permute.xlu0 %366
      %s370 = scalar_lea.vmem [#allocation2], 48
      %371 = vst.msk [vmem:[%s370] sm:$0xff] %vm319, %v365
      %372 = vst.msk [vmem:[%s370 + $0x8] sm:$0xff] %vm319, %v367
      %373 = vrot.lane.b32.xlu0 %v311, 104
      %v374 = vpop.permute.xlu0 %373
      %375 = vrot.lane.b32.xlu0 %v316, 104
      %v376 = vpop.permute.xlu0 %375
      %s379 = scalar_lea.vmem [#allocation3], 48
      %380 = vst.msk [vmem:[%s379] sm:$0xff] %vm319, %v374
      %381 = vst.msk [vmem:[%s379 + $0x8] sm:$0xff] %vm319, %v376
      %vm382 = vcmask 57344
      %383 = vst.msk [vmem:[#allocation18] sm:$0x1] %vm382, 0.0
      %384 = vst.msk [vmem:[#allocation18 + $0x1] sm:$0x1] %vm382, 0.0
    $region77: #{tpu_custom_call.1} parent=1 // pred_fallthru
      _
    %s385 = smul.u32 0, 8
    %s386 = scalar_lea.vmem [#allocation5], %s385
    %v387 = vld [vmem:[%s386] sm:$0xff]
    %v388 = vld [vmem:[%s386 + $0x8] sm:$0xff]
    %v389 = vld [vmem:[#allocation8] sm:$0xff]
    %v390 = vld [vmem:[#allocation8 + $0x8] sm:$0xff]
    %v391 = vld [vmem:[#allocation8 + $0x10] sm:$0xff]
    %v392 = vld [vmem:[#allocation8 + $0x18] sm:$0xff]
    %v393 = vld [vmem:[%s2] sm:$0x1]
    %v395 = vlaneseq
    %v396 = vshrl.u32 %v395, 7
    %v397 = vsub.s32 0, %v396
    %v398 = vrot.slane %v393, %v397
    %vm400 = vcmask 261120
    %v402 = vsel %vm400, %v387, 0
    %v405 = vsel %vm400, %v388, 0
    %407 = vmatprep.subr.mxu0 0.0
    %408 = vmatpush1.msra.mxu0 %v389
    %409 = vmatprep.subr.mxu0 0.0
    %410 = vmatpush1.msra.mxu0 %v390
    %411 = vmatprep.subr.mxu0 0.0
    %412 = vmatpush1.msra.mxu0 %v391
    %413 = vmatprep.subr.mxu0 0.0
    %414 = vmatpush1.msra.mxu0 %v392
    %415 = vmatprep.subr.mxu0 0.0
    %416 = vmatpush1.msra.mxu0 0.0
    %417 = vmatprep.subr.mxu0 0.0
    %418 = vmatpush1.msra.mxu0 0.0
    %419 = vmatprep.subr.mxu0 0.0
    %420 = vmatpush1.msra.mxu0 0.0
    %421 = vmatprep.subr.mxu0 0.0
    %422 = vmatpush1.msra.mxu0 0.0
    %423 = vmatprep.subr.mxu0 0.0
    %424 = vmatpush1.msra.mxu0 0.0
    %425 = vmatprep.subr.mxu0 0.0
    %426 = vmatpush1.msra.mxu0 0.0
    %427 = vmatprep.subr.mxu0 0.0
    %428 = vmatpush1.msra.mxu0 0.0
    %429 = vmatprep.subr.mxu0 0.0
    %430 = vmatpush1.msra.mxu0 0.0
    %431 = vmatprep.subr.mxu0 0.0
    %432 = vmatpush1.msra.mxu0 0.0
    %433 = vmatprep.subr.mxu0 0.0
    %434 = vmatpush1.msra.mxu0 0.0
    %435 = vmatprep.subr.mxu0 0.0
    %436 = vmatpush1.msra.mxu0 0.0
    %437 = vmatprep.subr.mxu0 0.0
    %438 = vmatpush1.msra.mxu0 0.0
    %439 = vmatprep.subr.mxu0 0.0
    %440 = vmatpush1.msra.mxu0 0.0
    %441 = vmatprep.subr.mxu0 0.0
    %442 = vmatpush1.msra.mxu0 0.0
    %443 = vmatprep.subr.mxu0 0.0
    %444 = vmatpush1.msra.mxu0 0.0
    %445 = vmatprep.subr.mxu0 0.0
    %446 = vmatpush1.msra.mxu0 0.0
    %447 = vmatprep.subr.mxu0 0.0
    %448 = vmatpush1.msra.mxu0 0.0
    %449 = vmatprep.subr.mxu0 0.0
    %450 = vmatpush1.msra.mxu0 0.0
    %451 = vmatprep.subr.mxu0 0.0
    %452 = vmatpush1.msra.mxu0 0.0
    %453 = vmatprep.subr.mxu0 0.0
    %454 = vmatpush1.msra.mxu0 0.0
    %455 = vmatprep.subr.mxu0 0.0
    %456 = vmatpush1.msra.mxu0 0.0
    %457 = vmatprep.subr.mxu0 0.0
    %458 = vmatpush1.msra.mxu0 0.0
    %459 = vmatprep.subr.mxu0 0.0
    %460 = vmatpush1.msra.mxu0 0.0
    %461 = vmatprep.subr.mxu0 0.0
    %462 = vmatpush1.msra.mxu0 0.0
    %463 = vmatprep.subr.mxu0 0.0
    %464 = vmatpush1.msra.mxu0 0.0
    %465 = vmatprep.subr.mxu0 0.0
    %466 = vmatpush1.msra.mxu0 0.0
    %467 = vmatprep.subr.mxu0 0.0
    %468 = vmatpush1.msra.mxu0 0.0
    %469 = vmatprep.subr.mxu0 0.0
    %470 = vmatpush1.msra.mxu0 0.0
    %471 = vmatprep.mubr.f32.mxu0 0.0
    %472 = vmatmul.mubr.f32.gmra.mrb[0].mxu0 %v402
    %v473 = vpop.f32.mrb[0].mxu0
    %v474 = vadd.f32 %v398, %v473
    %v475 = vpop.f32.mrb[0].mxu0
    %476 = vmatprep.mubr.f32.mxu0 0.0
    %477 = vmatmul.mubr.f32.gmra.mrb[0].mxu0 %v405
    %v478 = vpop.f32.mrb[0].mxu0
    %v479 = vadd.f32 %v398, %v478
    %v480 = vpop.f32.mrb[0].mxu0
    %481 = vdwg.mxu0
    %v482 = vmul.f32 %v474, 0.35355338
    %v483 = vmul.f32 %v479, 0.35355338
    %vm484 = vcmask 64512
    %485 = vst.msk [vmem:[#allocation4] sm:$0xff] %vm484, %v482
    %486 = vst.msk [vmem:[#allocation4 + $0x8] sm:$0xff] %vm484, %v483
    %489 = vrot.lane.b32.xlu0 %v482, 120
    %v490 = vpop.permute.xlu0 %489
    %491 = vrot.lane.b32.xlu0 %v483, 120
    %v492 = vpop.permute.xlu0 %491
    %s495 = scalar_lea.vmem [#allocation4], 16
    %496 = vst.msk [vmem:[%s495] sm:$0xff] %vm484, %v490
    %497 = vst.msk [vmem:[%s495 + $0x8] sm:$0xff] %vm484, %v492
    %498 = vrot.lane.b32.xlu0 %v482, 112
    %v499 = vpop.permute.xlu0 %498
    %500 = vrot.lane.b32.xlu0 %v483, 112
    %v501 = vpop.permute.xlu0 %500
    %s504 = scalar_lea.vmem [#allocation4], 32
    %505 = vst.msk [vmem:[%s504] sm:$0xff] %vm484, %v499
    %506 = vst.msk [vmem:[%s504 + $0x8] sm:$0xff] %vm484, %v501
    %507 = vrot.lane.b32.xlu0 %v482, 104
    %v508 = vpop.permute.xlu0 %507
    %509 = vrot.lane.b32.xlu0 %v483, 104
    %v510 = vpop.permute.xlu0 %509
    %s513 = scalar_lea.vmem [#allocation4], 48
    %514 = vst.msk [vmem:[%s513] sm:$0xff] %vm484, %v508
    %515 = vst.msk [vmem:[%s513 + $0x8] sm:$0xff] %vm484, %v510
    loop: start=0, step=1, limit=4
    $region78: #{tpu_custom_call.1} parent=1 // loop_pre_header
      _
    $region79: #{tpu_custom_call.1} parent=1 // loop_header
      %s517 = sphi 0, %s521
      %p518 = scmp.ge.s32.totalorder %s517, 4
      %v522 = vphi 0.0, %v959
      %v523 = vphi 0.0, %v960
      %v524 = vphi 0.0, %v728
      %v525 = vphi 0.0, %v729
    $region80: #{tpu_custom_call.1} parent=1 // loop_header_branch
      %520 = sbr.rel (%p518) target = $region84
    $region81: #{tpu_custom_call.1} parent=1 // loop_body
      %s526 = smul.u32 %s517, 16
      %s527 = scalar_lea.vmem [#allocation4], %s526
      %v528 = vld [vmem:[%s527] sm:$0xff]
      %v529 = vld [vmem:[%s527 + $0x8] sm:$0xff]
      %s530 = scalar_lea.vmem [#allocation2], %s526
      %v531 = vld [vmem:[%s530] sm:$0xff]
      %v532 = vld [vmem:[%s530 + $0x8] sm:$0xff]
      %s533 = scalar_lea.vmem [#allocation3], %s526
      %v534 = vld [vmem:[%s533] sm:$0xff]
      %v535 = vld [vmem:[%s533 + $0x8] sm:$0xff]
      %v537 = vsel %vm484, %v528, 0
      %v540 = vsel %vm484, %v531, 0
      %542 = vmatprep.subr.mxu0 0.0
      %543 = vmatpush1.xpose.msra.mxu0 %v540
      %544 = vmatprep.subr.mxu0 0.0
      %545 = vmatpush1.xpose.msra.mxu0 0.0
      %546 = vmatprep.subr.mxu0 0.0
      %547 = vmatpush1.xpose.msra.mxu0 0.0
      %548 = vmatprep.subr.mxu0 0.0
      %549 = vmatpush1.xpose.msra.mxu0 0.0
      %550 = vmatprep.subr.mxu0 0.0
      %551 = vmatpush1.xpose.msra.mxu0 0.0
      %552 = vmatprep.subr.mxu0 0.0
      %553 = vmatpush1.xpose.msra.mxu0 0.0
      %554 = vmatprep.subr.mxu0 0.0
      %555 = vmatpush1.xpose.msra.mxu0 0.0
      %556 = vmatprep.subr.mxu0 0.0
      %557 = vmatpush1.xpose.msra.mxu0 0.0
      %558 = vmatprep.subr.mxu0 0.0
      %559 = vmatpush1.xpose.msra.mxu0 0.0
      %560 = vmatprep.subr.mxu0 0.0
      %561 = vmatpush1.xpose.msra.mxu0 0.0
      %562 = vmatprep.subr.mxu0 0.0
      %563 = vmatpush1.xpose.msra.mxu0 0.0
      %564 = vmatprep.subr.mxu0 0.0
      %565 = vmatpush1.xpose.msra.mxu0 0.0
      %566 = vmatprep.subr.mxu0 0.0
      %567 = vmatpush1.xpose.msra.mxu0 0.0
      %568 = vmatprep.subr.mxu0 0.0
      %569 = vmatpush1.xpose.msra.mxu0 0.0
      %570 = vmatprep.subr.mxu0 0.0
      %571 = vmatpush1.xpose.msra.mxu0 0.0
      %572 = vmatprep.subr.mxu0 0.0
      %573 = vmatpush1.xpose.msra.mxu0 0.0
      %574 = vmatprep.subr.mxu0 0.0
      %575 = vmatpush1.xpose.msra.mxu0 0.0
      %576 = vmatprep.subr.mxu0 0.0
      %577 = vmatpush1.xpose.msra.mxu0 0.0
      %578 = vmatprep.subr.mxu0 0.0
      %579 = vmatpush1.xpose.msra.mxu0 0.0
      %580 = vmatprep.subr.mxu0 0.0
      %581 = vmatpush1.xpose.msra.mxu0 0.0
      %582 = vmatprep.subr.mxu0 0.0
      %583 = vmatpush1.xpose.msra.mxu0 0.0
      %584 = vmatprep.subr.mxu0 0.0
      %585 = vmatpush1.xpose.msra.mxu0 0.0
      %586 = vmatprep.subr.mxu0 0.0
      %587 = vmatpush1.xpose.msra.mxu0 0.0
      %588 = vmatprep.subr.mxu0 0.0
      %589 = vmatpush1.xpose.msra.mxu0 0.0
      %590 = vmatprep.subr.mxu0 0.0
      %591 = vmatpush1.xpose.msra.mxu0 0.0
      %592 = vmatprep.subr.mxu0 0.0
      %593 = vmatpush1.xpose.msra.mxu0 0.0
      %594 = vmatprep.subr.mxu0 0.0
      %595 = vmatpush1.xpose.msra.mxu0 0.0
      %596 = vmatprep.subr.mxu0 0.0
      %597 = vmatpush1.xpose.msra.mxu0 0.0
      %598 = vmatprep.subr.mxu0 0.0
      %599 = vmatpush1.xpose.msra.mxu0 0.0
      %600 = vmatprep.subr.mxu0 0.0
      %601 = vmatpush1.xpose.msra.mxu0 0.0
      %602 = vmatprep.subr.mxu0 0.0
      %603 = vmatpush1.xpose.msra.mxu0 0.0
      %604 = vmatprep.subr.mxu0 0.0
      %605 = vmatpush1.xpose.msra.mxu0 0.0
      %606 = vmatprep.mubr.f32.mxu0 0.0
      %607 = vmatmul.mubr.f32.gmra.mrb[0].mxu0 %v537
      %v608 = vpop.f32.mrb[0].mxu0
      %v609 = vadd.f32 0.0, %v608
      %v610 = vpop.f32.mrb[0].mxu0
      %611 = vdwg.mxu0
      %v613 = vsel %vm484, %v529, 0
      %v616 = vsel %vm484, %v532, 0
      %618 = vmatprep.subr.mxu0 0.0
      %619 = vmatpush1.xpose.msra.mxu0 %v616
      %620 = vmatprep.subr.mxu0 0.0
      %621 = vmatpush1.xpose.msra.mxu0 0.0
      %622 = vmatprep.subr.mxu0 0.0
      %623 = vmatpush1.xpose.msra.mxu0 0.0
      %624 = vmatprep.subr.mxu0 0.0
      %625 = vmatpush1.xpose.msra.mxu0 0.0
      %626 = vmatprep.subr.mxu0 0.0
      %627 = vmatpush1.xpose.msra.mxu0 0.0
      %628 = vmatprep.subr.mxu0 0.0
      %629 = vmatpush1.xpose.msra.mxu0 0.0
      %630 = vmatprep.subr.mxu0 0.0
      %631 = vmatpush1.xpose.msra.mxu0 0.0
      %632 = vmatprep.subr.mxu0 0.0
      %633 = vmatpush1.xpose.msra.mxu0 0.0
      %634 = vmatprep.subr.mxu0 0.0
      %635 = vmatpush1.xpose.msra.mxu0 0.0
      %636 = vmatprep.subr.mxu0 0.0
      %637 = vmatpush1.xpose.msra.mxu0 0.0
      %638 = vmatprep.subr.mxu0 0.0
      %639 = vmatpush1.xpose.msra.mxu0 0.0
      %640 = vmatprep.subr.mxu0 0.0
      %641 = vmatpush1.xpose.msra.mxu0 0.0
      %642 = vmatprep.subr.mxu0 0.0
      %643 = vmatpush1.xpose.msra.mxu0 0.0
      %644 = vmatprep.subr.mxu0 0.0
      %645 = vmatpush1.xpose.msra.mxu0 0.0
      %646 = vmatprep.subr.mxu0 0.0
      %647 = vmatpush1.xpose.msra.mxu0 0.0
      %648 = vmatprep.subr.mxu0 0.0
      %649 = vmatpush1.xpose.msra.mxu0 0.0
      %650 = vmatprep.subr.mxu0 0.0
      %651 = vmatpush1.xpose.msra.mxu0 0.0
      %652 = vmatprep.subr.mxu0 0.0
      %653 = vmatpush1.xpose.msra.mxu0 0.0
      %654 = vmatprep.subr.mxu0 0.0
      %655 = vmatpush1.xpose.msra.mxu0 0.0
      %656 = vmatprep.subr.mxu0 0.0
      %657 = vmatpush1.xpose.msra.mxu0 0.0
      %658 = vmatprep.subr.mxu0 0.0
      %659 = vmatpush1.xpose.msra.mxu0 0.0
      %660 = vmatprep.subr.mxu0 0.0
      %661 = vmatpush1.xpose.msra.mxu0 0.0
      %662 = vmatprep.subr.mxu0 0.0
      %663 = vmatpush1.xpose.msra.mxu0 0.0
      %664 = vmatprep.subr.mxu0 0.0
      %665 = vmatpush1.xpose.msra.mxu0 0.0
      %666 = vmatprep.subr.mxu0 0.0
      %667 = vmatpush1.xpose.msra.mxu0 0.0
      %668 = vmatprep.subr.mxu0 0.0
      %669 = vmatpush1.xpose.msra.mxu0 0.0
      %670 = vmatprep.subr.mxu0 0.0
      %671 = vmatpush1.xpose.msra.mxu0 0.0
      %672 = vmatprep.subr.mxu0 0.0
      %673 = vmatpush1.xpose.msra.mxu0 0.0
      %674 = vmatprep.subr.mxu0 0.0
      %675 = vmatpush1.xpose.msra.mxu0 0.0
      %676 = vmatprep.subr.mxu0 0.0
      %677 = vmatpush1.xpose.msra.mxu0 0.0
      %678 = vmatprep.subr.mxu0 0.0
      %679 = vmatpush1.xpose.msra.mxu0 0.0
      %680 = vmatprep.subr.mxu0 0.0
      %681 = vmatpush1.xpose.msra.mxu0 0.0
      %682 = vmatprep.mubr.f32.mxu0 0.0
      %683 = vmatmul.mubr.f32.gmra.mrb[0].mxu0 %v613
      %v684 = vpop.f32.mrb[0].mxu0
      %v685 = vadd.f32 0.0, %v684
      %v686 = vpop.f32.mrb[0].mxu0
      %687 = vdwg.mxu0
      %v688 = vsel %vm484, %v609, -inf
      %689 = vmax.xlane.f32.xlu0 %v688
      %v690 = vpop.xlane.xlu0 %689
      %v691 = vsel %vm484, %v685, -inf
      %692 = vmax.xlane.f32.xlu0 %v691
      %v693 = vpop.xlane.xlu0 %692
      %v694 = vsub.f32 %v609, %v690
      %v695 = vsub.f32 %v685, %v693
      %v696 = vmul.f32 %v694, 1.442695
      %v697 = vpow.pop %v696
      %v698 = vmul.f32 %v695, 1.442695
      %v699 = vpow.pop %v698
      %v700 = vsel %vm484, %v697, 0.0
      %701 = vadd.xlane.f32.xlu0 %v700
      %v702 = vpop.xlane.xlu0 %701
      %v703 = vsel %vm484, %v699, 0.0
      %704 = vadd.xlane.f32.xlu0 %v703
      %v705 = vpop.xlane.xlu0 %704
      %v706 = vrcp.pop %v702
      %v707 = vrcp.pop %v705
      %v708 = vmul.f32 %v697, %v706
      %v709 = vmul.f32 %v699, %v707
      %s710 = smul.u32 %s517, 8
      %s711 = scalar_lea.vmem [#allocation20], %s710
      %712 = vst.msk [vmem:[%s711] sm:$0xff] %vm484, %v708
      %713 = vst.msk [vmem:[%s711 + $0x20] sm:$0xff] %vm484, %v709
      %v714 = vsel %vm484, %v708, 0.0
      %v715 = vrot.slane %v714, 4
      %v716 = vadd.f32 %v714, %v715
      %v717 = vrot.slane %v716, 2
      %v718 = vadd.f32 %v716, %v717
      %v719 = vrot.slane %v718, 1
      %v720 = vadd.f32 %v718, %v719
      %v721 = vsel %vm484, %v709, 0.0
      %v722 = vrot.slane %v721, 4
      %v723 = vadd.f32 %v721, %v722
      %v724 = vrot.slane %v723, 2
      %v725 = vadd.f32 %v723, %v724
      %v726 = vrot.slane %v725, 1
      %v727 = vadd.f32 %v725, %v726
      %v728 = vadd.f32 %v524, %v720
      %v729 = vadd.f32 %v525, %v727
      %v731 = vsel %vm484, %v708, 0
      %733 = vmatprep.subr.mxu0 0.0
      %734 = vmatpush1.msra.mxu0 %v534
      %735 = vmatprep.subr.mxu0 0.0
      %736 = vmatpush1.msra.mxu0 0.0
      %737 = vmatprep.subr.mxu0 0.0
      %738 = vmatpush1.msra.mxu0 0.0
      %739 = vmatprep.subr.mxu0 0.0
      %740 = vmatpush1.msra.mxu0 0.0
      %741 = vmatprep.subr.mxu0 0.0
      %742 = vmatpush1.msra.mxu0 0.0
      %743 = vmatprep.subr.mxu0 0.0
      %744 = vmatpush1.msra.mxu0 0.0
      %745 = vmatprep.subr.mxu0 0.0
      %746 = vmatpush1.msra.mxu0 0.0
      %747 = vmatprep.subr.mxu0 0.0
      %748 = vmatpush1.msra.mxu0 0.0
      %749 = vmatprep.subr.mxu0 0.0
      %750 = vmatpush1.msra.mxu0 0.0
      %751 = vmatprep.subr.mxu0 0.0
      %752 = vmatpush1.msra.mxu0 0.0
      %753 = vmatprep.subr.mxu0 0.0
      %754 = vmatpush1.msra.mxu0 0.0
      %755 = vmatprep.subr.mxu0 0.0
      %756 = vmatpush1.msra.mxu0 0.0
      %757 = vmatprep.subr.mxu0 0.0
      %758 = vmatpush1.msra.mxu0 0.0
      %759 = vmatprep.subr.mxu0 0.0
      %760 = vmatpush1.msra.mxu0 0.0
      %761 = vmatprep.subr.mxu0 0.0
      %762 = vmatpush1.msra.mxu0 0.0
      %763 = vmatprep.subr.mxu0 0.0
      %764 = vmatpush1.msra.mxu0 0.0
      %765 = vmatprep.subr.mxu0 0.0
      %766 = vmatpush1.msra.mxu0 0.0
      %767 = vmatprep.subr.mxu0 0.0
      %768 = vmatpush1.msra.mxu0 0.0
      %769 = vmatprep.subr.mxu0 0.0
      %770 = vmatpush1.msra.mxu0 0.0
      %771 = vmatprep.subr.mxu0 0.0
      %772 = vmatpush1.msra.mxu0 0.0
      %773 = vmatprep.subr.mxu0 0.0
      %774 = vmatpush1.msra.mxu0 0.0
      %775 = vmatprep.subr.mxu0 0.0
      %776 = vmatpush1.msra.mxu0 0.0
      %777 = vmatprep.subr.mxu0 0.0
      %778 = vmatpush1.msra.mxu0 0.0
      %779 = vmatprep.subr.mxu0 0.0
      %780 = vmatpush1.msra.mxu0 0.0
      %781 = vmatprep.subr.mxu0 0.0
      %782 = vmatpush1.msra.mxu0 0.0
      %783 = vmatprep.subr.mxu0 0.0
      %784 = vmatpush1.msra.mxu0 0.0
      %785 = vmatprep.subr.mxu0 0.0
      %786 = vmatpush1.msra.mxu0 0.0
      %787 = vmatprep.subr.mxu0 0.0
      %788 = vmatpush1.msra.mxu0 0.0
      %789 = vmatprep.subr.mxu0 0.0
      %790 = vmatpush1.msra.mxu0 0.0
      %791 = vmatprep.subr.mxu0 0.0
      %792 = vmatpush1.msra.mxu0 0.0
      %793 = vmatprep.subr.mxu0 0.0
      %794 = vmatpush1.msra.mxu0 0.0
      %795 = vmatprep.subr.mxu0 0.0
      %796 = vmatpush1.msra.mxu0 0.0
      %797 = vmatprep.mubr.f32.mxu0 0.0
      %798 = vmatmul.mubr.f32.gmra.mrb[0].mxu0 %v731
      %v799 = vpop.f32.mrb[0].mxu0
      %v800 = vadd.f32 0.0, %v799
      %v801 = vpop.f32.mrb[0].mxu0
      %802 = vdwg.mxu0
      %v804 = vsel %vm484, %v709, 0
      %806 = vmatprep.subr.mxu0 0.0
      %807 = vmatpush1.msra.mxu0 %v535
      %808 = vmatprep.subr.mxu0 0.0
      %809 = vmatpush1.msra.mxu0 0.0
      %810 = vmatprep.subr.mxu0 0.0
      %811 = vmatpush1.msra.mxu0 0.0
      %812 = vmatprep.subr.mxu0 0.0
      %813 = vmatpush1.msra.mxu0 0.0
      %814 = vmatprep.subr.mxu0 0.0
      %815 = vmatpush1.msra.mxu0 0.0
      %816 = vmatprep.subr.mxu0 0.0
      %817 = vmatpush1.msra.mxu0 0.0
      %818 = vmatprep.subr.mxu0 0.0
      %819 = vmatpush1.msra.mxu0 0.0
      %820 = vmatprep.subr.mxu0 0.0
      %821 = vmatpush1.msra.mxu0 0.0
      %822 = vmatprep.subr.mxu0 0.0
      %823 = vmatpush1.msra.mxu0 0.0
      %824 = vmatprep.subr.mxu0 0.0
      %825 = vmatpush1.msra.mxu0 0.0
      %826 = vmatprep.subr.mxu0 0.0
      %827 = vmatpush1.msra.mxu0 0.0
      %828 = vmatprep.subr.mxu0 0.0
      %829 = vmatpush1.msra.mxu0 0.0
      %830 = vmatprep.subr.mxu0 0.0
      %831 = vmatpush1.msra.mxu0 0.0
      %832 = vmatprep.subr.mxu0 0.0
      %833 = vmatpush1.msra.mxu0 0.0
      %834 = vmatprep.subr.mxu0 0.0
      %835 = vmatpush1.msra.mxu0 0.0
      %836 = vmatprep.subr.mxu0 0.0
      %837 = vmatpush1.msra.mxu0 0.0
      %838 = vmatprep.subr.mxu0 0.0
      %839 = vmatpush1.msra.mxu0 0.0
      %840 = vmatprep.subr.mxu0 0.0
      %841 = vmatpush1.msra.mxu0 0.0
      %842 = vmatprep.subr.mxu0 0.0
      %843 = vmatpush1.msra.mxu0 0.0
      %844 = vmatprep.subr.mxu0 0.0
      %845 = vmatpush1.msra.mxu0 0.0
      %846 = vmatprep.subr.mxu0 0.0
      %847 = vmatpush1.msra.mxu0 0.0
      %848 = vmatprep.subr.mxu0 0.0
      %849 = vmatpush1.msra.mxu0 0.0
      %850 = vmatprep.subr.mxu0 0.0
      %851 = vmatpush1.msra.mxu0 0.0
      %852 = vmatprep.subr.mxu0 0.0
      %853 = vmatpush1.msra.mxu0 0.0
      %854 = vmatprep.subr.mxu0 0.0
      %855 = vmatpush1.msra.mxu0 0.0
      %856 = vmatprep.subr.mxu0 0.0
      %857 = vmatpush1.msra.mxu0 0.0
      %858 = vmatprep.subr.mxu0 0.0
      %859 = vmatpush1.msra.mxu0 0.0
      %860 = vmatprep.subr.mxu0 0.0
      %861 = vmatpush1.msra.mxu0 0.0
      %862 = vmatprep.subr.mxu0 0.0
      %863 = vmatpush1.msra.mxu0 0.0
      %864 = vmatprep.subr.mxu0 0.0
      %865 = vmatpush1.msra.mxu0 0.0
      %866 = vmatprep.subr.mxu0 0.0
      %867 = vmatpush1.msra.mxu0 0.0
      %868 = vmatprep.subr.mxu0 0.0
      %869 = vmatpush1.msra.mxu0 0.0
      %870 = vmatprep.mubr.f32.mxu0 0.0
      %871 = vmatmul.mubr.f32.gmra.mrb[0].mxu0 %v804
      %v872 = vpop.f32.mrb[0].mxu0
      %v873 = vadd.f32 0.0, %v872
      %v874 = vpop.f32.mrb[0].mxu0
      %875 = vdwg.mxu0
      %s876 = scalar_lea.vmem [#allocation14], %s710
      %v877 = vld [vmem:[%s876] sm:$0xff]
      %v879 = vsel %vm484, %v800, 0
      %v882 = vsel %vm484, %v873, 0
      %884 = vmatprep.subr.mxu0 0.0
      %885 = vmatpush1.msra.mxu0 %v877
      %886 = vmatprep.subr.mxu0 0.0
      %887 = vmatpush1.msra.mxu0 0.0
      %888 = vmatprep.subr.mxu0 0.0
      %889 = vmatpush1.msra.mxu0 0.0
      %890 = vmatprep.subr.mxu0 0.0
      %891 = vmatpush1.msra.mxu0 0.0
      %892 = vmatprep.subr.mxu0 0.0
      %893 = vmatpush1.msra.mxu0 0.0
      %894 = vmatprep.subr.mxu0 0.0
      %895 = vmatpush1.msra.mxu0 0.0
      %896 = vmatprep.subr.mxu0 0.0
      %897 = vmatpush1.msra.mxu0 0.0
      %898 = vmatprep.subr.mxu0 0.0
      %899 = vmatpush1.msra.mxu0 0.0
      %900 = vmatprep.subr.mxu0 0.0
      %901 = vmatpush1.msra.mxu0 0.0
      %902 = vmatprep.subr.mxu0 0.0
      %903 = vmatpush1.msra.mxu0 0.0
      %904 = vmatprep.subr.mxu0 0.0
      %905 = vmatpush1.msra.mxu0 0.0
      %906 = vmatprep.subr.mxu0 0.0
      %907 = vmatpush1.msra.mxu0 0.0
      %908 = vmatprep.subr.mxu0 0.0
      %909 = vmatpush1.msra.mxu0 0.0
      %910 = vmatprep.subr.mxu0 0.0
      %911 = vmatpush1.msra.mxu0 0.0
      %912 = vmatprep.subr.mxu0 0.0
      %913 = vmatpush1.msra.mxu0 0.0
      %914 = vmatprep.subr.mxu0 0.0
      %915 = vmatpush1.msra.mxu0 0.0
      %916 = vmatprep.subr.mxu0 0.0
      %917 = vmatpush1.msra.mxu0 0.0
      %918 = vmatprep.subr.mxu0 0.0
      %919 = vmatpush1.msra.mxu0 0.0
      %920 = vmatprep.subr.mxu0 0.0
      %921 = vmatpush1.msra.mxu0 0.0
      %922 = vmatprep.subr.mxu0 0.0
      %923 = vmatpush1.msra.mxu0 0.0
      %924 = vmatprep.subr.mxu0 0.0
      %925 = vmatpush1.msra.mxu0 0.0
      %926 = vmatprep.subr.mxu0 0.0
      %927 = vmatpush1.msra.mxu0 0.0
      %928 = vmatprep.subr.mxu0 0.0
      %929 = vmatpush1.msra.mxu0 0.0
      %930 = vmatprep.subr.mxu0 0.0
      %931 = vmatpush1.msra.mxu0 0.0
      %932 = vmatprep.subr.mxu0 0.0
      %933 = vmatpush1.msra.mxu0 0.0
      %934 = vmatprep.subr.mxu0 0.0
      %935 = vmatpush1.msra.mxu0 0.0
      %936 = vmatprep.subr.mxu0 0.0
      %937 = vmatpush1.msra.mxu0 0.0
      %938 = vmatprep.subr.mxu0 0.0
      %939 = vmatpush1.msra.mxu0 0.0
      %940 = vmatprep.subr.mxu0 0.0
      %941 = vmatpush1.msra.mxu0 0.0
      %942 = vmatprep.subr.mxu0 0.0
      %943 = vmatpush1.msra.mxu0 0.0
      %944 = vmatprep.subr.mxu0 0.0
      %945 = vmatpush1.msra.mxu0 0.0
      %946 = vmatprep.subr.mxu0 0.0
      %947 = vmatpush1.msra.mxu0 0.0
      %948 = vmatprep.mubr.f32.mxu0 0.0
      %949 = vmatmul.mubr.f32.gmra.mrb[0].mxu0 %v879
      %v950 = vpop.f32.mrb[0].mxu0
      %v951 = vadd.f32 0.0, %v950
      %v952 = vpop.f32.mrb[0].mxu0
      %953 = vmatprep.mubr.f32.mxu0 0.0
      %954 = vmatmul.mubr.f32.gmra.mrb[0].mxu0 %v882
      %v955 = vpop.f32.mrb[0].mxu0
      %v956 = vadd.f32 0.0, %v955
      %v957 = vpop.f32.mrb[0].mxu0
      %958 = vdwg.mxu0
      %v959 = vadd.f32 %v522, %v951
      %v960 = vadd.f32 %v523, %v956
    $region82: #{tpu_custom_call.1} parent=1 // loop_footer
      %s521 = sadd.s32 1, %s517
    $region83: #{tpu_custom_call.1} parent=1 // loop_footer_branch
      %516 = sbr.rel target = $region79
    $region84: #{tpu_custom_call.1} parent=1 // loop_exit
      _
    %v961 = vld [vmem:[#allocation18] sm:$0x1]
    %v962 = vld [vmem:[#allocation18 + $0x1] sm:$0x1]
    %v963 = vadd.f32 %v961, %v524
    %v964 = vadd.f32 %v962, %v525
    %vm965 = vcmask 57344
    %966 = vst.msk [vmem:[#allocation18] sm:$0x1] %vm965, %v963
    %967 = vst.msk [vmem:[#allocation18 + $0x1] sm:$0x1] %vm965, %v964
    %v968 = vld [vmem:[#allocation16] sm:$0x1]
    %v970 = vlaneseq
    %v971 = vshrl.u32 %v970, 7
    %v972 = vsub.s32 0, %v971
    %v973 = vrot.slane %v968, %v972
    %v975 = vadd.f32 %v522, %v973
    %v976 = vadd.f32 %v523, %v973
    %v977 = vld [vmem:[%s9] sm:$0xff]
    %v978 = vld [vmem:[%s9 + $0x8] sm:$0xff]
    %v979 = vld [vmem:[%s9 + $0x10] sm:$0xff]
    %v980 = vld [vmem:[%s9 + $0x18] sm:$0xff]
    %v981 = vld [vmem:[%s10] sm:$0x1]
    %v983 = vlaneseq
    %v984 = vshrl.u32 %v983, 7
    %v985 = vsub.s32 0, %v984
    %v986 = vrot.slane %v981, %v985
    %v989 = vsel %vm400, %v975, 0
    %v992 = vsel %vm400, %v976, 0
    %994 = vmatprep.subr.mxu0 0.0
    %995 = vmatpush1.msra.mxu0 %v977
    %996 = vmatprep.subr.mxu0 0.0
    %997 = vmatpush1.msra.mxu0 %v978
    %998 = vmatprep.subr.mxu0 0.0
    %999 = vmatpush1.msra.mxu0 %v979
    %1000 = vmatprep.subr.mxu0 0.0
    %1001 = vmatpush1.msra.mxu0 %v980
    %1002 = vmatprep.subr.mxu0 0.0
    %1003 = vmatpush1.msra.mxu0 0.0
    %1004 = vmatprep.subr.mxu0 0.0
    %1005 = vmatpush1.msra.mxu0 0.0
    %1006 = vmatprep.subr.mxu0 0.0
    %1007 = vmatpush1.msra.mxu0 0.0
    %1008 = vmatprep.subr.mxu0 0.0
    %1009 = vmatpush1.msra.mxu0 0.0
    %1010 = vmatprep.subr.mxu0 0.0
    %1011 = vmatpush1.msra.mxu0 0.0
    %1012 = vmatprep.subr.mxu0 0.0
    %1013 = vmatpush1.msra.mxu0 0.0
    %1014 = vmatprep.subr.mxu0 0.0
    %1015 = vmatpush1.msra.mxu0 0.0
    %1016 = vmatprep.subr.mxu0 0.0
    %1017 = vmatpush1.msra.mxu0 0.0
    %1018 = vmatprep.subr.mxu0 0.0
    %1019 = vmatpush1.msra.mxu0 0.0
    %1020 = vmatprep.subr.mxu0 0.0
    %1021 = vmatpush1.msra.mxu0 0.0
    %1022 = vmatprep.subr.mxu0 0.0
    %1023 = vmatpush1.msra.mxu0 0.0
    %1024 = vmatprep.subr.mxu0 0.0
    %1025 = vmatpush1.msra.mxu0 0.0
    %1026 = vmatprep.subr.mxu0 0.0
    %1027 = vmatpush1.msra.mxu0 0.0
    %1028 = vmatprep.subr.mxu0 0.0
    %1029 = vmatpush1.msra.mxu0 0.0
    %1030 = vmatprep.subr.mxu0 0.0
    %1031 = vmatpush1.msra.mxu0 0.0
    %1032 = vmatprep.subr.mxu0 0.0
    %1033 = vmatpush1.msra.mxu0 0.0
    %1034 = vmatprep.subr.mxu0 0.0
    %1035 = vmatpush1.msra.mxu0 0.0
    %1036 = vmatprep.subr.mxu0 0.0
    %1037 = vmatpush1.msra.mxu0 0.0
    %1038 = vmatprep.subr.mxu0 0.0
    %1039 = vmatpush1.msra.mxu0 0.0
    %1040 = vmatprep.subr.mxu0 0.0
    %1041 = vmatpush1.msra.mxu0 0.0
    %1042 = vmatprep.subr.mxu0 0.0
    %1043 = vmatpush1.msra.mxu0 0.0
    %1044 = vmatprep.subr.mxu0 0.0
    %1045 = vmatpush1.msra.mxu0 0.0
    %1046 = vmatprep.subr.mxu0 0.0
    %1047 = vmatpush1.msra.mxu0 0.0
    %1048 = vmatprep.subr.mxu0 0.0
    %1049 = vmatpush1.msra.mxu0 0.0
    %1050 = vmatprep.subr.mxu0 0.0
    %1051 = vmatpush1.msra.mxu0 0.0
    %1052 = vmatprep.subr.mxu0 0.0
    %1053 = vmatpush1.msra.mxu0 0.0
    %1054 = vmatprep.subr.mxu0 0.0
    %1055 = vmatpush1.msra.mxu0 0.0
    %1056 = vmatprep.subr.mxu0 0.0
    %1057 = vmatpush1.msra.mxu0 0.0
    %1058 = vmatprep.mubr.f32.mxu0 0.0
    %1059 = vmatmul.mubr.f32.gmra.mrb[0].mxu0 %v989
    %v1060 = vpop.f32.mrb[0].mxu0
    %v1061 = vadd.f32 %v986, %v1060
    %v1062 = vpop.f32.mrb[0].mxu0
    %1063 = vmatprep.mubr.f32.mxu0 0.0
    %1064 = vmatmul.mubr.f32.gmra.mrb[0].mxu0 %v992
    %v1065 = vpop.f32.mrb[0].mxu0
    %v1066 = vadd.f32 %v986, %v1065
    %v1067 = vpop.f32.mrb[0].mxu0
    %1068 = vdwg.mxu0
    %1069 = vst.msk [vmem:[#allocation17] sm:$0xff] %vm400, %v1061
    %1070 = vst.msk [vmem:[#allocation17 + $0x8] sm:$0xff] %vm400, %v1066
    // Predicated region
    $region85: #{tpu_custom_call.1} parent=1 // pred_check
      %p1071 = pneg %p134
    $region86: #{tpu_custom_call.1} parent=1 // pred_check_branch
      %1073 = sbr.rel (%p1071) target = $region88
    $region87: #{tpu_custom_call.1} parent=1 // pred_region
      %v1074 = vld [vmem:[#allocation18] sm:$0x1]
      %v1075 = vld [vmem:[#allocation18 + $0x1] sm:$0x1]
      %v1076 = vmul.f32 %v1074, 0.125
      %v1077 = vmul.f32 %v1075, 0.125
      %v1078 = vsel %vm965, %v1076, inf
      %1079 = vmin.xlane.f32.xlu0 %v1078
      %v1080 = vpop.xlane.xlu0 %1079
      %v1081 = vsel %vm965, %v1077, inf
      %1082 = vmin.xlane.f32.xlu0 %v1081
      %v1083 = vpop.xlane.xlu0 %1082
      %v1084 = vsel %vm965, %v1076, -inf
      %1085 = vmax.xlane.f32.xlu0 %v1084
      %v1086 = vpop.xlane.xlu0 %1085
      %v1087 = vsel %vm965, %v1077, -inf
      %1088 = vmax.xlane.f32.xlu0 %v1087
      %v1089 = vpop.xlane.xlu0 %1088
      %v1090 = vsub.f32 %v1076, %v1080
      %v1091 = vsub.f32 %v1077, %v1083
      %v1092 = vsub.f32 %v1086, %v1080
      %v1093 = vsub.f32 %v1089, %v1083
      %v1094 = vadd.f32 %v1092, 1e-09
      %v1095 = vadd.f32 %v1093, 1e-09
      %v1096 = vrcp.pop %v1094
      %v1097 = vmul.f32 %v1090, %v1096
      %v1098 = vrcp.pop %v1095
      %v1099 = vmul.f32 %v1091, %v1098
      %1100 = vst.msk [vmem:[#allocation18] sm:$0x1] %vm965, %v1097
      %1101 = vst.msk [vmem:[#allocation18 + $0x1] sm:$0x1] %vm965, %v1099
    $region88: #{tpu_custom_call.1} parent=1 // pred_fallthru
      _
    // Predicated region
    $region89: #{tpu_custom_call.1} parent=1 // pred_check
      _
    $region90: #{tpu_custom_call.1} parent=1 // pred_check_branch
      %1103 = sbr.rel (0) target = $region92
    $region91: #{tpu_custom_call.1} parent=1 // pred_region
      %s1105 = ssub.s32 256, 256
      %1106 = vsyncadd [#allocation7], %s1105
      %s1107 = sshll.u32 [#allocation17], 4
      %s1108 = int_to_ptr.vmem [resolvable:$true] %s1107
      %1113 = dma.vmem_to_hbm [thread:$0]  %s1108, 256, %s11, [#allocation7], 128, 128, 8
    $region92: #{tpu_custom_call.1} parent=1 // pred_fallthru
      _
    // Predicated region
    $region93: #{tpu_custom_call.1} parent=1 // pred_check
      _
    $region94: #{tpu_custom_call.1} parent=1 // pred_check_branch
      %1115 = sbr.rel (0) target = $region96
    $region95: #{tpu_custom_call.1} parent=1 // pred_region
      %s1117 = ssub.s32 32, 32
      %1118 = vsyncadd [#allocation19], %s1117
      %s1119 = sshll.u32 [#allocation18], 4
      %s1120 = int_to_ptr.vmem [resolvable:$true] %s1119
      %1125 = dma.vmem_to_hbm [thread:$0]  %s1120, 32, %s12, [#allocation19], 16, 16, 1
    $region96: #{tpu_custom_call.1} parent=1 // pred_fallthru
      _
    // Predicated region
    $region97: #{tpu_custom_call.1} parent=1 // pred_check
      _
    $region98: #{tpu_custom_call.1} parent=1 // pred_check_branch
      %1127 = sbr.rel (0) target = $region100
    $region99: #{tpu_custom_call.1} parent=1 // pred_region
      %s1129 = ssub.s32 1024, 1024
      %1130 = vsyncadd [#allocation19], %s1129
      %s1131 = sshll.u32 [#allocation20], 4
      %s1132 = int_to_ptr.vmem [resolvable:$true] %s1131
      %1137 = dma.vmem_to_hbm [thread:$0]  %s1132, 1024, %s13, [#allocation19], 128, 128, 8
    $region100: #{tpu_custom_call.1} parent=1 // pred_fallthru
      _
    // Predicated region
    $region101: #{tpu_custom_call.1} parent=1 // pred_check
      _
    $region102: #{tpu_custom_call.1} parent=1 // pred_check_branch
      %1139 = sbr.rel (0) target = $region104
    $region103: #{tpu_custom_call.1} parent=1 // pred_region
      %1140 = dma.done [#allocation7], 256
    $region104: #{tpu_custom_call.1} parent=1 // pred_fallthru
      _
    // Predicated region
    $region105: #{tpu_custom_call.1} parent=1 // pred_check
      _
    $region106: #{tpu_custom_call.1} parent=1 // pred_check_branch
      %1142 = sbr.rel (0) target = $region108
    $region107: #{tpu_custom_call.1} parent=1 // pred_region
      %1143 = dma.done [#allocation19], 32
    $region108: #{tpu_custom_call.1} parent=1 // pred_fallthru
      _
    // Predicated region
    $region109: #{tpu_custom_call.1} parent=1 // pred_check
      _
    $region110: #{tpu_custom_call.1} parent=1 // pred_check_branch
      %1145 = sbr.rel (0) target = $region112
    $region111: #{tpu_custom_call.1} parent=1 // pred_region
      %1146 = dma.done [#allocation19], 1024
    $region112: #{tpu_custom_call.1} parent=1 // pred_fallthru
      _
    %1147 = vsyncpa [#allocation6], 1
    %1148 = vsyncpa [#allocation9], 1
    %1149 = vsyncpa [#allocation12], 1
    %1150 = vsyncpa [#allocation15], 1
    %1151 = vsyncpa [#allocation7], 1
    %1152 = vsyncpa [#allocation19], 1

</llo_original>
